<compile_context>
chip_gen: v5e
topology: v5e:2x2
jax: 0.10.0
libtpu: 0.0.40
codegen_flags: <defaults>
</compile_context>

<pallas_src>
import numpy as np
import jax
import jax.numpy as jnp
from jax.experimental import pallas as pl
from jax.experimental.pallas import tpu as pltpu

# ----------------------------- problem sizes -----------------------------
N, CIN, H, W = 2, 4, 16, 16      # x: (N, CIN, H, W)  NCHW
DCTX = 16                        # y_context: (N, DCTX)
HIDDEN = 8                       # hidden conv channels   (W*HIDDEN = 128 lanes)
NCLS = 4                         # unet output channels (argmax'ed over)


# ----------------------------- fused Pallas kernel -----------------------------
def _fused_kernel(x_ref, y_ref, s_ref, b1_ref, base_ref, wc_ref, b2_ref, b2bias_ref, o_ref):
    # x_ref     : (1, H, W*CIN)            image b, channels-last rows
    # y_ref     : (1, 1, DCTX)             context vector for image b
    # s_ref     : (3, H, H)                0/1 row-shift ("same" conv along H) matrices
    # b1_ref    : (3, W*CIN, W*HIDDEN)     banded conv1 weights (W shift + channel mix)
    # base_ref  : (1, 1, W*HIDDEN)         conv1 bias + context bias, tiled over W
    # wc_ref    : (DCTX, W*HIDDEN)         context embedding weights, tiled over W
    # b2_ref    : (NCLS, 3, W*HIDDEN, W)   banded conv2 weights, split per output class
    # b2bias_ref: (NCLS, 1, W)             conv2 bias, tiled over W
    # o_ref     : (1, H, W) int32          argmax output
    f32 = jnp.float32
    x = x_ref[0]                                                        # (H, W*CIN)

    # ---- context embedding folded with conv1 bias: one tiny MXU matmul ----
    ctx = base_ref[0] + jnp.dot(y_ref[0], wc_ref[...],
                                preferred_element_type=f32)             # (1, W*HIDDEN)

    # ---- conv1 (3x3, same) + context FiLM bias + ReLU ----
    hidden = jnp.zeros((H, W * HIDDEN), f32)
    for ky in range(3):
        rows = jnp.dot(s_ref[ky], x, preferred_element_type=f32)        # (H, W*CIN)
        hidden = hidden + jnp.dot(rows, b1_ref[ky],
                                  preferred_element_type=f32)           # (H, W*HIDDEN)
    hidden = jnp.maximum(hidden + ctx, 0.0)                             # (H, W*HIDDEN)

    # ---- conv2 (3x3, same) per class plane + running argmax ----
    sh = [jnp.dot(s_ref[ky], hidden, preferred_element_type=f32)        # row-shifted hidden
          for ky in range(3)]                                           # each (H, W*HIDDEN)

    best_val = None
    best_idx = jnp.zeros((H, W), jnp.int32)
    for co in range(NCLS):
        acc = jnp.zeros((H, W), f32)
        for ky in range(3):
            acc = acc + jnp.dot(sh[ky], b2_ref[co, ky],
                                preferred_element_type=f32)             # (H, W)
        plane = acc + b2bias_ref[co]                                    # + (1, W) broadcast
        if co == 0:
            best_val = plane
        else:
            better = plane > best_val                                   # strict > : first max wins
            best_val = jnp.where(better, plane, best_val)
            best_idx = jnp.where(better, jnp.int32(co), best_idx)
    o_ref[0] = best_idx


# ----------------------------- structure-matrix construction -----------------------------
def _band_matrix(w_hwio):
    """w: (3,3,c_in,c_out) HWIO -> B: (3, W*c_in, W*c_out).
    For input rows already shifted by (ky-1), B[ky] implements the 3-tap 'same' conv along
    W plus channel mixing:  out[x*c_out+co] = sum_{kx,ci} w[ky,kx,ci,co] * in[(x+kx-1)*c_in+ci]
    with zero contribution outside [0, W)."""
    _, _, c_in, c_out = w_hwio.shape
    B = jnp.zeros((3, W * c_in, W * c_out), jnp.float32)
    xo = np.arange(W)
    ci = np.arange(c_in)
    co = np.arange(c_out)
    for ky in range(3):
        for kx in range(3):
            xs = xo + kx - 1
            valid = (xs >= 0) & (xs < W)
            xo_v, xs_v = xo[valid], xs[valid]
            r = xs_v[:, None, None] * c_in + ci[None, :, None]      # (n, c_in, 1)
            c = xo_v[:, None, None] * c_out + co[None, None, :]     # (n, 1, c_out)
            B = B.at[ky, r, c].set(w_hwio[ky, kx][None, :, :])
    return B


def _row_shift_matrices():
    """S[ky] @ M selects rows M[y+ky-1] (zero row when out of range)."""
    S = np.zeros((3, H, H), np.float32)
    yo = np.arange(H)
    for ky in range(3):
        ys = yo + ky - 1
        valid = (ys >= 0) & (ys < H)
        S[ky, yo[valid], ys[valid]] = 1.0
    return jnp.asarray(S)


def build_kernel_constants(params):
    """One-time weight preprocessing into lane-dense kernel constants."""
    b1 = _band_matrix(params["w1"])                                     # (3, W*CIN, W*HIDDEN)
    b2c = _band_matrix(params["w2"])                                    # (3, W*HIDDEN, W*NCLS)
    b2 = jnp.transpose(b2c.reshape(3, W * HIDDEN, W, NCLS),
                       (3, 0, 1, 2))                                    # (NCLS, 3, W*HIDDEN, W)
    b2bias = jnp.tile(params["b2"][:, None, None], (1, 1, W))           # (NCLS, 1, W)
    # conv1 bias + context bias, tiled over W -> column x*HIDDEN + c
    base = jnp.tile((params["b1"] + params["bc"])[None, :], (1, W))     # (1, W*HIDDEN)
    base = base.reshape(1, 1, W * HIDDEN)
    # context embedding weights tiled over W -> WCW[d, x*HIDDEN + c] = wc[d, c]
    wcw = jnp.tile(params["wc"], (1, W))                                # (DCTX, W*HIDDEN)
    return {"S": _row_shift_matrices(), "B1": b1, "base": base, "WCW": wcw,
            "B2": b2, "b2bias": b2bias}


# ----------------------------- module forward -----------------------------
def init_params(key):
    k1, k2, k3, k4, k5, k6 = jax.random.split(key, 6)
    s = 0.1
    return {
        "w1": jax.random.normal(k1, (3, 3, CIN, HIDDEN), jnp.float32) * s,   # HWIO
        "b1": jax.random.normal(k2, (HIDDEN,), jnp.float32) * s,
        "wc": jax.random.normal(k3, (DCTX, HIDDEN), jnp.float32) * s,
        "bc": jax.random.normal(k4, (HIDDEN,), jnp.float32) * s,
        "w2": jax.random.normal(k5, (3, 3, HIDDEN, NCLS), jnp.float32) * s,  # HWIO
        "b2": jax.random.normal(k6, (NCLS,), jnp.float32) * s,
    }


@jax.jit
def inference2_forward(x_nchw, y_context, consts):
    """Equivalent of Inference2.forward: unet(x, y_context) then argmax over dim=1."""
    n, cin, h, w = x_nchw.shape
    x_rows = jnp.transpose(x_nchw, (0, 2, 3, 1)).reshape(n, h, w * cin)       # (N, H, W*CIN)
    y3 = y_context.reshape(n, 1, DCTX)                                        # (N, 1, DCTX)

    out = pl.pallas_call(
        _fused_kernel,
        out_shape=jax.ShapeDtypeStruct((n, h, w), jnp.int32),
        grid=(n,),
        in_specs=[
            pl.BlockSpec((1, h, w * cin), lambda b: (b, 0, 0)),               # x rows (per image)
            pl.BlockSpec((1, 1, DCTX), lambda b: (b, 0, 0)),                  # y_context (per image)
            pl.BlockSpec((3, h, h), lambda b: (0, 0, 0)),                     # S  (constant)
            pl.BlockSpec((3, w * cin, w * HIDDEN), lambda b: (0, 0, 0)),      # B1 (constant)
            pl.BlockSpec((1, 1, w * HIDDEN), lambda b: (0, 0, 0)),            # base bias (constant)
            pl.BlockSpec((DCTX, w * HIDDEN), lambda b: (0, 0)),               # WCW (constant)
            pl.BlockSpec((NCLS, 3, w * HIDDEN, w), lambda b: (0, 0, 0, 0)),   # B2 (constant)
            pl.BlockSpec((NCLS, 1, w), lambda b: (0, 0, 0)),                  # conv2 bias (constant)
        ],
        out_specs=pl.BlockSpec((1, h, w), lambda b: (b, 0, 0)),
        compiler_params=pltpu.CompilerParams(dimension_semantics=("parallel",)),
    )(x_rows, y3, consts["S"], consts["B1"], consts["base"], consts["WCW"],
      consts["B2"], consts["b2bias"])
    return out


# ----------------------------- plain-JAX reference (for a correctness check) -----------------------------
def _reference_logits(x_nchw, y_context, params):
    n, cin, h, w = x_nchw.shape
    xh = jnp.transpose(x_nchw, (0, 2, 3, 1))

    def conv3x3(inp, wgt):
        pad = jnp.pad(inp, ((0, 0), (1, 1), (1, 1), (0, 0)))
        out = jnp.zeros(inp.shape[:3] + (wgt.shape[-1],), jnp.float32)
        for ky in range(3):
            for kx in range(3):
                out = out + jnp.einsum("nhwc,cd->nhwd",
                                       pad[:, ky:ky + h, kx:kx + w, :], wgt[ky, kx])
        return out

    ctx = params["b1"][None, :] + y_context @ params["wc"] + params["bc"][None, :]
    h1 = jnp.maximum(conv3x3(xh, params["w1"]) + ctx[:, None, None, :], 0.0)
    return conv3x3(h1, params["w2"]) + params["b2"][None, None, None, :]


if __name__ == "__main__":
    key = jax.random.PRNGKey(0)
    kx, kyc, kp = jax.random.split(key, 3)
    x = jax.random.normal(kx, (N, CIN, H, W), jnp.float32)           # NCHW like PyTorch
    y_context = jax.random.normal(kyc, (N, DCTX), jnp.float32)
    params = init_params(kp)
    consts = build_kernel_constants(params)                          # weight preprocessing (once)

    out = inference2_forward(x, y_context, consts)
    out = jax.block_until_ready(out)

    assert out.shape == (N, H, W)
    assert out.dtype == jnp.int32
    assert int(out.min()) >= 0 and int(out.max()) < NCLS

    # kernel argmax must pick a (near-)maximal class of the reference logits everywhere
    ref_logits = _reference_logits(x, y_context, params)
    chosen = jnp.take_along_axis(ref_logits, out[..., None], axis=-1)[..., 0]
    assert bool(jnp.all(chosen >= ref_logits.max(axis=-1) - 1e-4))

    print("KERNEL_OK")
</pallas_src>

<mosaic_0001>
module attributes {stable_mosaic.version = 11 : i64} {
  func.func @_fused_kernel(%arg0: i32, %arg1: memref<1x16x64xf32, #tpu.memory_space<vmem>>, %arg2: memref<1x1x16xf32, #tpu.memory_space<vmem>>, %arg3: memref<3x16x16xf32, #tpu.memory_space<vmem>>, %arg4: memref<3x64x128xf32, #tpu.memory_space<vmem>>, %arg5: memref<1x1x128xf32, #tpu.memory_space<vmem>>, %arg6: memref<16x128xf32, #tpu.memory_space<vmem>>, %arg7: memref<4x3x128x16xf32, #tpu.memory_space<vmem>>, %arg8: memref<4x1x16xf32, #tpu.memory_space<vmem>>, %arg9: memref<1x16x16xi32, #tpu.memory_space<vmem>>) attributes {dimension_semantics = [#tpu.dimension_semantics<parallel>], iteration_bounds = array<i64: 2>, scalar_prefetch = 0 : i64, scratch_operands = 0 : i64, tpu.core_type = #tpu.core_type<tc>, window_params = [{transform_indices = @transform_0, window_bounds = array<i64: 1, 16, 64>}, {transform_indices = @transform_1, window_bounds = array<i64: 1, 1, 16>}, {pipeline_mode = #tpu.pipeline_mode<synchronous>, transform_indices = @transform_2, window_bounds = array<i64: 3, 16, 16>}, {pipeline_mode = #tpu.pipeline_mode<synchronous>, transform_indices = @transform_3, window_bounds = array<i64: 3, 64, 128>}, {pipeline_mode = #tpu.pipeline_mode<synchronous>, transform_indices = @transform_4, window_bounds = array<i64: 1, 1, 128>}, {pipeline_mode = #tpu.pipeline_mode<synchronous>, transform_indices = @transform_5, window_bounds = array<i64: 16, 128>}, {pipeline_mode = #tpu.pipeline_mode<synchronous>, transform_indices = @transform_6, window_bounds = array<i64: 4, 3, 128, 16>}, {pipeline_mode = #tpu.pipeline_mode<synchronous>, transform_indices = @transform_7, window_bounds = array<i64: 4, 1, 16>}, {transform_indices = @transform_8, window_bounds = array<i64: 1, 16, 16>}]} {
    %c0 = arith.constant 0 : index
    %c0_0 = arith.constant 0 : index
    %c0_1 = arith.constant 0 : index
    %0 = vector.load %arg1[%c0, %c0_0, %c0_1] : memref<1x16x64xf32, #tpu.memory_space<vmem>>, vector<1x16x64xf32>
    %1 = vector.shape_cast %0 : vector<1x16x64xf32> to vector<16x64xf32>
    %c0_2 = arith.constant 0 : index
    %c0_3 = arith.constant 0 : index
    %c0_4 = arith.constant 0 : index
    %2 = vector.load %arg5[%c0_2, %c0_3, %c0_4] : memref<1x1x128xf32, #tpu.memory_space<vmem>>, vector<1x1x128xf32>
    %3 = vector.shape_cast %2 : vector<1x1x128xf32> to vector<1x128xf32>
    %c0_5 = arith.constant 0 : index
    %c0_6 = arith.constant 0 : index
    %c0_7 = arith.constant 0 : index
    %4 = vector.load %arg2[%c0_5, %c0_6, %c0_7] : memref<1x1x16xf32, #tpu.memory_space<vmem>>, vector<1x1x16xf32>
    %5 = vector.shape_cast %4 : vector<1x1x16xf32> to vector<1x16xf32>
    %c0_8 = arith.constant 0 : index
    %c0_9 = arith.constant 0 : index
    %6 = vector.load %arg6[%c0_8, %c0_9] : memref<16x128xf32, #tpu.memory_space<vmem>>, vector<16x128xf32>
    %cst = arith.constant dense<0.000000e+00> : vector<1x128xf32>
    %7 = tpu.matmul %5, %6, %cst {dimension_numbers = #tpu.dot_dimension_numbers<[1], [0], [0], [1], [0, 0, 1, 1], [], []>} : vector<1x16xf32>, vector<16x128xf32>, vector<1x128xf32> -> vector<1x128xf32>
    %8 = arith.addf %3, %7 : vector<1x128xf32>
    %cst_10 = arith.constant 0.000000e+00 : f32
    %9 = vector.broadcast %cst_10 : f32 to vector<16x128xf32>
    %c0_11 = arith.constant 0 : index
    %c0_12 = arith.constant 0 : index
    %c0_13 = arith.constant 0 : index
    %10 = vector.load %arg3[%c0_11, %c0_12, %c0_13] : memref<3x16x16xf32, #tpu.memory_space<vmem>>, vector<1x16x16xf32>
    %11 = vector.shape_cast %10 : vector<1x16x16xf32> to vector<16x16xf32>
    %cst_14 = arith.constant dense<0.000000e+00> : vector<16x64xf32>
    %12 = tpu.matmul %11, %1, %cst_14 {dimension_numbers = #tpu.dot_dimension_numbers<[1], [0], [0], [1], [0, 0, 1, 1], [], []>} : vector<16x16xf32>, vector<16x64xf32>, vector<16x64xf32> -> vector<16x64xf32>
    %c0_15 = arith.constant 0 : index
    %c0_16 = arith.constant 0 : index
    %c0_17 = arith.constant 0 : index
    %13 = vector.load %arg4[%c0_15, %c0_16, %c0_17] : memref<3x64x128xf32, #tpu.memory_space<vmem>>, vector<1x64x128xf32>
    %14 = vector.shape_cast %13 : vector<1x64x128xf32> to vector<64x128xf32>
    %cst_18 = arith.constant dense<0.000000e+00> : vector<16x128xf32>
    %15 = tpu.matmul %12, %14, %cst_18 {dimension_numbers = #tpu.dot_dimension_numbers<[1], [0], [0], [1], [0, 0, 1, 1], [], []>} : vector<16x64xf32>, vector<64x128xf32>, vector<16x128xf32> -> vector<16x128xf32>
    %16 = arith.addf %9, %15 : vector<16x128xf32>
    %c1 = arith.constant 1 : index
    %c0_19 = arith.constant 0 : index
    %c0_20 = arith.constant 0 : index
    %17 = vector.load %arg3[%c1, %c0_19, %c0_20] : memref<3x16x16xf32, #tpu.memory_space<vmem>>, vector<1x16x16xf32>
    %18 = vector.shape_cast %17 : vector<1x16x16xf32> to vector<16x16xf32>
    %cst_21 = arith.constant dense<0.000000e+00> : vector<16x64xf32>
    %19 = tpu.matmul %18, %1, %cst_21 {dimension_numbers = #tpu.dot_dimension_numbers<[1], [0], [0], [1], [0, 0, 1, 1], [], []>} : vector<16x16xf32>, vector<16x64xf32>, vector<16x64xf32> -> vector<16x64xf32>
    %c1_22 = arith.constant 1 : index
    %c0_23 = arith.constant 0 : index
    %c0_24 = arith.constant 0 : index
    %20 = vector.load %arg4[%c1_22, %c0_23, %c0_24] : memref<3x64x128xf32, #tpu.memory_space<vmem>>, vector<1x64x128xf32>
    %21 = vector.shape_cast %20 : vector<1x64x128xf32> to vector<64x128xf32>
    %cst_25 = arith.constant dense<0.000000e+00> : vector<16x128xf32>
    %22 = tpu.matmul %19, %21, %cst_25 {dimension_numbers = #tpu.dot_dimension_numbers<[1], [0], [0], [1], [0, 0, 1, 1], [], []>} : vector<16x64xf32>, vector<64x128xf32>, vector<16x128xf32> -> vector<16x128xf32>
    %23 = arith.addf %16, %22 : vector<16x128xf32>
    %c2 = arith.constant 2 : index
    %c0_26 = arith.constant 0 : index
    %c0_27 = arith.constant 0 : index
    %24 = vector.load %arg3[%c2, %c0_26, %c0_27] : memref<3x16x16xf32, #tpu.memory_space<vmem>>, vector<1x16x16xf32>
    %25 = vector.shape_cast %24 : vector<1x16x16xf32> to vector<16x16xf32>
    %cst_28 = arith.constant dense<0.000000e+00> : vector<16x64xf32>
    %26 = tpu.matmul %25, %1, %cst_28 {dimension_numbers = #tpu.dot_dimension_numbers<[1], [0], [0], [1], [0, 0, 1, 1], [], []>} : vector<16x16xf32>, vector<16x64xf32>, vector<16x64xf32> -> vector<16x64xf32>
    %c2_29 = arith.constant 2 : index
    %c0_30 = arith.constant 0 : index
    %c0_31 = arith.constant 0 : index
    %27 = vector.load %arg4[%c2_29, %c0_30, %c0_31] : memref<3x64x128xf32, #tpu.memory_space<vmem>>, vector<1x64x128xf32>
    %28 = vector.shape_cast %27 : vector<1x64x128xf32> to vector<64x128xf32>
    %cst_32 = arith.constant dense<0.000000e+00> : vector<16x128xf32>
    %29 = tpu.matmul %26, %28, %cst_32 {dimension_numbers = #tpu.dot_dimension_numbers<[1], [0], [0], [1], [0, 0, 1, 1], [], []>} : vector<16x64xf32>, vector<64x128xf32>, vector<16x128xf32> -> vector<16x128xf32>
    %30 = arith.addf %23, %29 : vector<16x128xf32>
    %31 = vector.broadcast %8 : vector<1x128xf32> to vector<16x128xf32>
    %32 = arith.addf %30, %31 : vector<16x128xf32>
    %cst_33 = arith.constant 0.000000e+00 : f32
    %33 = vector.broadcast %cst_33 : f32 to vector<16x128xf32>
    %34 = arith.maximumf %32, %33 : vector<16x128xf32>
    %c0_34 = arith.constant 0 : index
    %c0_35 = arith.constant 0 : index
    %c0_36 = arith.constant 0 : index
    %35 = vector.load %arg3[%c0_34, %c0_35, %c0_36] : memref<3x16x16xf32, #tpu.memory_space<vmem>>, vector<1x16x16xf32>
    %36 = vector.shape_cast %35 : vector<1x16x16xf32> to vector<16x16xf32>
    %cst_37 = arith.constant dense<0.000000e+00> : vector<16x128xf32>
    %37 = tpu.matmul %36, %34, %cst_37 {dimension_numbers = #tpu.dot_dimension_numbers<[1], [0], [0], [1], [0, 0, 1, 1], [], []>} : vector<16x16xf32>, vector<16x128xf32>, vector<16x128xf32> -> vector<16x128xf32>
    %c1_38 = arith.constant 1 : index
    %c0_39 = arith.constant 0 : index
    %c0_40 = arith.constant 0 : index
    %38 = vector.load %arg3[%c1_38, %c0_39, %c0_40] : memref<3x16x16xf32, #tpu.memory_space<vmem>>, vector<1x16x16xf32>
    %39 = vector.shape_cast %38 : vector<1x16x16xf32> to vector<16x16xf32>
    %cst_41 = arith.constant dense<0.000000e+00> : vector<16x128xf32>
    %40 = tpu.matmul %39, %34, %cst_41 {dimension_numbers = #tpu.dot_dimension_numbers<[1], [0], [0], [1], [0, 0, 1, 1], [], []>} : vector<16x16xf32>, vector<16x128xf32>, vector<16x128xf32> -> vector<16x128xf32>
    %c2_42 = arith.constant 2 : index
    %c0_43 = arith.constant 0 : index
    %c0_44 = arith.constant 0 : index
    %41 = vector.load %arg3[%c2_42, %c0_43, %c0_44] : memref<3x16x16xf32, #tpu.memory_space<vmem>>, vector<1x16x16xf32>
    %42 = vector.shape_cast %41 : vector<1x16x16xf32> to vector<16x16xf32>
    %cst_45 = arith.constant dense<0.000000e+00> : vector<16x128xf32>
    %43 = tpu.matmul %42, %34, %cst_45 {dimension_numbers = #tpu.dot_dimension_numbers<[1], [0], [0], [1], [0, 0, 1, 1], [], []>} : vector<16x16xf32>, vector<16x128xf32>, vector<16x128xf32> -> vector<16x128xf32>
    %c0_i32 = arith.constant 0 : i32
    %44 = vector.broadcast %c0_i32 : i32 to vector<16x16xi32>
    %cst_46 = arith.constant 0.000000e+00 : f32
    %45 = vector.broadcast %cst_46 : f32 to vector<16x16xf32>
    %c0_47 = arith.constant 0 : index
    %c0_48 = arith.constant 0 : index
    %c0_49 = arith.constant 0 : index
    %c0_50 = arith.constant 0 : index
    %46 = vector.load %arg7[%c0_47, %c0_48, %c0_49, %c0_50] : memref<4x3x128x16xf32, #tpu.memory_space<vmem>>, vector<1x1x128x16xf32>
    %47 = vector.shape_cast %46 : vector<1x1x128x16xf32> to vector<128x16xf32>
    %cst_51 = arith.constant dense<0.000000e+00> : vector<16x16xf32>
    %48 = tpu.matmul %37, %47, %cst_51 {dimension_numbers = #tpu.dot_dimension_numbers<[1], [0], [0], [1], [0, 0, 1, 1], [], []>} : vector<16x128xf32>, vector<128x16xf32>, vector<16x16xf32> -> vector<16x16xf32>
    %49 = arith.addf %45, %48 : vector<16x16xf32>
    %c0_52 = arith.constant 0 : index
    %c1_53 = arith.constant 1 : index
    %c0_54 = arith.constant 0 : index
    %c0_55 = arith.constant 0 : index
    %50 = vector.load %arg7[%c0_52, %c1_53, %c0_54, %c0_55] : memref<4x3x128x16xf32, #tpu.memory_space<vmem>>, vector<1x1x128x16xf32>
    %51 = vector.shape_cast %50 : vector<1x1x128x16xf32> to vector<128x16xf32>
    %cst_56 = arith.constant dense<0.000000e+00> : vector<16x16xf32>
    %52 = tpu.matmul %40, %51, %cst_56 {dimension_numbers = #tpu.dot_dimension_numbers<[1], [0], [0], [1], [0, 0, 1, 1], [], []>} : vector<16x128xf32>, vector<128x16xf32>, vector<16x16xf32> -> vector<16x16xf32>
    %53 = arith.addf %49, %52 : vector<16x16xf32>
    %c0_57 = arith.constant 0 : index
    %c2_58 = arith.constant 2 : index
    %c0_59 = arith.constant 0 : index
    %c0_60 = arith.constant 0 : index
    %54 = vector.load %arg7[%c0_57, %c2_58, %c0_59, %c0_60] : memref<4x3x128x16xf32, #tpu.memory_space<vmem>>, vector<1x1x128x16xf32>
    %55 = vector.shape_cast %54 : vector<1x1x128x16xf32> to vector<128x16xf32>
    %cst_61 = arith.constant dense<0.000000e+00> : vector<16x16xf32>
    %56 = tpu.matmul %43, %55, %cst_61 {dimension_numbers = #tpu.dot_dimension_numbers<[1], [0], [0], [1], [0, 0, 1, 1], [], []>} : vector<16x128xf32>, vector<128x16xf32>, vector<16x16xf32> -> vector<16x16xf32>
    %57 = arith.addf %53, %56 : vector<16x16xf32>
    %c0_62 = arith.constant 0 : index
    %c0_63 = arith.constant 0 : index
    %c0_64 = arith.constant 0 : index
    %58 = vector.load %arg8[%c0_62, %c0_63, %c0_64] : memref<4x1x16xf32, #tpu.memory_space<vmem>>, vector<1x1x16xf32>
    %59 = vector.shape_cast %58 : vector<1x1x16xf32> to vector<1x16xf32>
    %60 = vector.broadcast %59 : vector<1x16xf32> to vector<16x16xf32>
    %61 = arith.addf %57, %60 : vector<16x16xf32>
    %cst_65 = arith.constant 0.000000e+00 : f32
    %62 = vector.broadcast %cst_65 : f32 to vector<16x16xf32>
    %c1_66 = arith.constant 1 : index
    %c0_67 = arith.constant 0 : index
    %c0_68 = arith.constant 0 : index
    %c0_69 = arith.constant 0 : index
    %63 = vector.load %arg7[%c1_66, %c0_67, %c0_68, %c0_69] : memref<4x3x128x16xf32, #tpu.memory_space<vmem>>, vector<1x1x128x16xf32>
    %64 = vector.shape_cast %63 : vector<1x1x128x16xf32> to vector<128x16xf32>
    %cst_70 = arith.constant dense<0.000000e+00> : vector<16x16xf32>
    %65 = tpu.matmul %37, %64, %cst_70 {dimension_numbers = #tpu.dot_dimension_numbers<[1], [0], [0], [1], [0, 0, 1, 1], [], []>} : vector<16x128xf32>, vector<128x16xf32>, vector<16x16xf32> -> vector<16x16xf32>
    %66 = arith.addf %62, %65 : vector<16x16xf32>
    %c1_71 = arith.constant 1 : index
    %c1_72 = arith.constant 1 : index
    %c0_73 = arith.constant 0 : index
    %c0_74 = arith.constant 0 : index
    %67 = vector.load %arg7[%c1_71, %c1_72, %c0_73, %c0_74] : memref<4x3x128x16xf32, #tpu.memory_space<vmem>>, vector<1x1x128x16xf32>
    %68 = vector.shape_cast %67 : vector<1x1x128x16xf32> to vector<128x16xf32>
    %cst_75 = arith.constant dense<0.000000e+00> : vector<16x16xf32>
    %69 = tpu.matmul %40, %68, %cst_75 {dimension_numbers = #tpu.dot_dimension_numbers<[1], [0], [0], [1], [0, 0, 1, 1], [], []>} : vector<16x128xf32>, vector<128x16xf32>, vector<16x16xf32> -> vector<16x16xf32>
    %70 = arith.addf %66, %69 : vector<16x16xf32>
    %c1_76 = arith.constant 1 : index
    %c2_77 = arith.constant 2 : index
    %c0_78 = arith.constant 0 : index
    %c0_79 = arith.constant 0 : index
    %71 = vector.load %arg7[%c1_76, %c2_77, %c0_78, %c0_79] : memref<4x3x128x16xf32, #tpu.memory_space<vmem>>, vector<1x1x128x16xf32>
    %72 = vector.shape_cast %71 : vector<1x1x128x16xf32> to vector<128x16xf32>
    %cst_80 = arith.constant dense<0.000000e+00> : vector<16x16xf32>
    %73 = tpu.matmul %43, %72, %cst_80 {dimension_numbers = #tpu.dot_dimension_numbers<[1], [0], [0], [1], [0, 0, 1, 1], [], []>} : vector<16x128xf32>, vector<128x16xf32>, vector<16x16xf32> -> vector<16x16xf32>
    %74 = arith.addf %70, %73 : vector<16x16xf32>
    %c1_81 = arith.constant 1 : index
    %c0_82 = arith.constant 0 : index
    %c0_83 = arith.constant 0 : index
    %75 = vector.load %arg8[%c1_81, %c0_82, %c0_83] : memref<4x1x16xf32, #tpu.memory_space<vmem>>, vector<1x1x16xf32>
    %76 = vector.shape_cast %75 : vector<1x1x16xf32> to vector<1x16xf32>
    %77 = vector.broadcast %76 : vector<1x16xf32> to vector<16x16xf32>
    %78 = arith.addf %74, %77 : vector<16x16xf32>
    %79 = arith.cmpf ogt, %78, %61 : vector<16x16xf32>
    %80 = arith.select %79, %78, %61 : vector<16x16xi1>, vector<16x16xf32>
    %c1_i32 = arith.constant 1 : i32
    %81 = vector.broadcast %c1_i32 : i32 to vector<16x16xi32>
    %82 = arith.select %79, %81, %44 : vector<16x16xi1>, vector<16x16xi32>
    %cst_84 = arith.constant 0.000000e+00 : f32
    %83 = vector.broadcast %cst_84 : f32 to vector<16x16xf32>
    %c2_85 = arith.constant 2 : index
    %c0_86 = arith.constant 0 : index
    %c0_87 = arith.constant 0 : index
    %c0_88 = arith.constant 0 : index
    %84 = vector.load %arg7[%c2_85, %c0_86, %c0_87, %c0_88] : memref<4x3x128x16xf32, #tpu.memory_space<vmem>>, vector<1x1x128x16xf32>
    %85 = vector.shape_cast %84 : vector<1x1x128x16xf32> to vector<128x16xf32>
    %cst_89 = arith.constant dense<0.000000e+00> : vector<16x16xf32>
    %86 = tpu.matmul %37, %85, %cst_89 {dimension_numbers = #tpu.dot_dimension_numbers<[1], [0], [0], [1], [0, 0, 1, 1], [], []>} : vector<16x128xf32>, vector<128x16xf32>, vector<16x16xf32> -> vector<16x16xf32>
    %87 = arith.addf %83, %86 : vector<16x16xf32>
    %c2_90 = arith.constant 2 : index
    %c1_91 = arith.constant 1 : index
    %c0_92 = arith.constant 0 : index
    %c0_93 = arith.constant 0 : index
    %88 = vector.load %arg7[%c2_90, %c1_91, %c0_92, %c0_93] : memref<4x3x128x16xf32, #tpu.memory_space<vmem>>, vector<1x1x128x16xf32>
    %89 = vector.shape_cast %88 : vector<1x1x128x16xf32> to vector<128x16xf32>
    %cst_94 = arith.constant dense<0.000000e+00> : vector<16x16xf32>
    %90 = tpu.matmul %40, %89, %cst_94 {dimension_numbers = #tpu.dot_dimension_numbers<[1], [0], [0], [1], [0, 0, 1, 1], [], []>} : vector<16x128xf32>, vector<128x16xf32>, vector<16x16xf32> -> vector<16x16xf32>
    %91 = arith.addf %87, %90 : vector<16x16xf32>
    %c2_95 = arith.constant 2 : index
    %c2_96 = arith.constant 2 : index
    %c0_97 = arith.constant 0 : index
    %c0_98 = arith.constant 0 : index
    %92 = vector.load %arg7[%c2_95, %c2_96, %c0_97, %c0_98] : memref<4x3x128x16xf32, #tpu.memory_space<vmem>>, vector<1x1x128x16xf32>
    %93 = vector.shape_cast %92 : vector<1x1x128x16xf32> to vector<128x16xf32>
    %cst_99 = arith.constant dense<0.000000e+00> : vector<16x16xf32>
    %94 = tpu.matmul %43, %93, %cst_99 {dimension_numbers = #tpu.dot_dimension_numbers<[1], [0], [0], [1], [0, 0, 1, 1], [], []>} : vector<16x128xf32>, vector<128x16xf32>, vector<16x16xf32> -> vector<16x16xf32>
    %95 = arith.addf %91, %94 : vector<16x16xf32>
    %c2_100 = arith.constant 2 : index
    %c0_101 = arith.constant 0 : index
    %c0_102 = arith.constant 0 : index
    %96 = vector.load %arg8[%c2_100, %c0_101, %c0_102] : memref<4x1x16xf32, #tpu.memory_space<vmem>>, vector<1x1x16xf32>
    %97 = vector.shape_cast %96 : vector<1x1x16xf32> to vector<1x16xf32>
    %98 = vector.broadcast %97 : vector<1x16xf32> to vector<16x16xf32>
    %99 = arith.addf %95, %98 : vector<16x16xf32>
    %100 = arith.cmpf ogt, %99, %80 : vector<16x16xf32>
    %101 = arith.select %100, %99, %80 : vector<16x16xi1>, vector<16x16xf32>
    %c2_i32 = arith.constant 2 : i32
    %102 = vector.broadcast %c2_i32 : i32 to vector<16x16xi32>
    %103 = arith.select %100, %102, %82 : vector<16x16xi1>, vector<16x16xi32>
    %cst_103 = arith.constant 0.000000e+00 : f32
    %104 = vector.broadcast %cst_103 : f32 to vector<16x16xf32>
    %c3 = arith.constant 3 : index
    %c0_104 = arith.constant 0 : index
    %c0_105 = arith.constant 0 : index
    %c0_106 = arith.constant 0 : index
    %105 = vector.load %arg7[%c3, %c0_104, %c0_105, %c0_106] : memref<4x3x128x16xf32, #tpu.memory_space<vmem>>, vector<1x1x128x16xf32>
    %106 = vector.shape_cast %105 : vector<1x1x128x16xf32> to vector<128x16xf32>
    %cst_107 = arith.constant dense<0.000000e+00> : vector<16x16xf32>
    %107 = tpu.matmul %37, %106, %cst_107 {dimension_numbers = #tpu.dot_dimension_numbers<[1], [0], [0], [1], [0, 0, 1, 1], [], []>} : vector<16x128xf32>, vector<128x16xf32>, vector<16x16xf32> -> vector<16x16xf32>
    %108 = arith.addf %104, %107 : vector<16x16xf32>
    %c3_108 = arith.constant 3 : index
    %c1_109 = arith.constant 1 : index
    %c0_110 = arith.constant 0 : index
    %c0_111 = arith.constant 0 : index
    %109 = vector.load %arg7[%c3_108, %c1_109, %c0_110, %c0_111] : memref<4x3x128x16xf32, #tpu.memory_space<vmem>>, vector<1x1x128x16xf32>
    %110 = vector.shape_cast %109 : vector<1x1x128x16xf32> to vector<128x16xf32>
    %cst_112 = arith.constant dense<0.000000e+00> : vector<16x16xf32>
    %111 = tpu.matmul %40, %110, %cst_112 {dimension_numbers = #tpu.dot_dimension_numbers<[1], [0], [0], [1], [0, 0, 1, 1], [], []>} : vector<16x128xf32>, vector<128x16xf32>, vector<16x16xf32> -> vector<16x16xf32>
    %112 = arith.addf %108, %111 : vector<16x16xf32>
    %c3_113 = arith.constant 3 : index
    %c2_114 = arith.constant 2 : index
    %c0_115 = arith.constant 0 : index
    %c0_116 = arith.constant 0 : index
    %113 = vector.load %arg7[%c3_113, %c2_114, %c0_115, %c0_116] : memref<4x3x128x16xf32, #tpu.memory_space<vmem>>, vector<1x1x128x16xf32>
    %114 = vector.shape_cast %113 : vector<1x1x128x16xf32> to vector<128x16xf32>
    %cst_117 = arith.constant dense<0.000000e+00> : vector<16x16xf32>
    %115 = tpu.matmul %43, %114, %cst_117 {dimension_numbers = #tpu.dot_dimension_numbers<[1], [0], [0], [1], [0, 0, 1, 1], [], []>} : vector<16x128xf32>, vector<128x16xf32>, vector<16x16xf32> -> vector<16x16xf32>
    %116 = arith.addf %112, %115 : vector<16x16xf32>
    %c3_118 = arith.constant 3 : index
    %c0_119 = arith.constant 0 : index
    %c0_120 = arith.constant 0 : index
    %117 = vector.load %arg8[%c3_118, %c0_119, %c0_120] : memref<4x1x16xf32, #tpu.memory_space<vmem>>, vector<1x1x16xf32>
    %118 = vector.shape_cast %117 : vector<1x1x16xf32> to vector<1x16xf32>
    %119 = vector.broadcast %118 : vector<1x16xf32> to vector<16x16xf32>
    %120 = arith.addf %116, %119 : vector<16x16xf32>
    %121 = arith.cmpf ogt, %120, %101 : vector<16x16xf32>
    %c3_i32 = arith.constant 3 : i32
    %122 = vector.broadcast %c3_i32 : i32 to vector<16x16xi32>
    %123 = arith.select %121, %122, %103 : vector<16x16xi1>, vector<16x16xi32>
    %c0_121 = arith.constant 0 : index
    %c0_122 = arith.constant 0 : index
    %c0_123 = arith.constant 0 : index
    %124 = vector.load %arg9[%c0_121, %c0_122, %c0_123] : memref<1x16x16xi32, #tpu.memory_space<vmem>>, vector<1x16x16xi32>
    %125 = vector.shape_cast %124 : vector<1x16x16xi32> to vector<16x16xi32>
    %126 = vector.shape_cast %123 : vector<16x16xi32> to vector<1x16x16xi32>
    tpu.vector_store %arg9[%c0_121, %c0_122, %c0_123], %126 {strides = array<i32>} : memref<1x16x16xi32, #tpu.memory_space<vmem>>, vector<1x16x16xi32>,
    return
  }
  func.func @transform_0(%arg0: i32) -> (i32, i32, i32) {
    %c0_i32 = arith.constant 0 : i32
    %c0_i32_0 = arith.constant 0 : i32
    %c0_i32_1 = arith.constant 0 : i32
    return %arg0, %c0_i32, %c0_i32_0 : i32, i32, i32
  }
  func.func @transform_1(%arg0: i32) -> (i32, i32, i32) {
    %c0_i32 = arith.constant 0 : i32
    %c0_i32_0 = arith.constant 0 : i32
    %c0_i32_1 = arith.constant 0 : i32
    return %arg0, %c0_i32, %c0_i32_0 : i32, i32, i32
  }
  func.func @transform_2(%arg0: i32) -> (i32, i32, i32) {
    %c0_i32 = arith.constant 0 : i32
    %c0_i32_0 = arith.constant 0 : i32
    %c0_i32_1 = arith.constant 0 : i32
    %c0_i32_2 = arith.constant 0 : i32
    return %c0_i32, %c0_i32_0, %c0_i32_1 : i32, i32, i32
  }
  func.func @transform_3(%arg0: i32) -> (i32, i32, i32) {
    %c0_i32 = arith.constant 0 : i32
    %c0_i32_0 = arith.constant 0 : i32
    %c0_i32_1 = arith.constant 0 : i32
    %c0_i32_2 = arith.constant 0 : i32
    return %c0_i32, %c0_i32_0, %c0_i32_1 : i32, i32, i32
  }
  func.func @transform_4(%arg0: i32) -> (i32, i32, i32) {
    %c0_i32 = arith.constant 0 : i32
    %c0_i32_0 = arith.constant 0 : i32
    %c0_i32_1 = arith.constant 0 : i32
    %c0_i32_2 = arith.constant 0 : i32
    return %c0_i32, %c0_i32_0, %c0_i32_1 : i32, i32, i32
  }
  func.func @transform_5(%arg0: i32) -> (i32, i32) {
    %c0_i32 = arith.constant 0 : i32
    %c0_i32_0 = arith.constant 0 : i32
    %c0_i32_1 = arith.constant 0 : i32
    return %c0_i32, %c0_i32_0 : i32, i32
  }
  func.func @transform_6(%arg0: i32) -> (i32, i32, i32, i32) {
    %c0_i32 = arith.constant 0 : i32
    %c0_i32_0 = arith.constant 0 : i32
    %c0_i32_1 = arith.constant 0 : i32
    %c0_i32_2 = arith.constant 0 : i32
    %c0_i32_3 = arith.constant 0 : i32
    return %c0_i32, %c0_i32_0, %c0_i32_1, %c0_i32_2 : i32, i32, i32, i32
  }
  func.func @transform_7(%arg0: i32) -> (i32, i32, i32) {
    %c0_i32 = arith.constant 0 : i32
    %c0_i32_0 = arith.constant 0 : i32
    %c0_i32_1 = arith.constant 0 : i32
    %c0_i32_2 = arith.constant 0 : i32
    return %c0_i32, %c0_i32_0, %c0_i32_1 : i32, i32, i32
  }
  func.func @transform_8(%arg0: i32) -> (i32, i32, i32) {
    %c0_i32 = arith.constant 0 : i32
    %c0_i32_0 = arith.constant 0 : i32
    %c0_i32_1 = arith.constant 0 : i32
    return %arg0, %c0_i32, %c0_i32_0 : i32, i32, i32
  }
}

</mosaic_0001>

<llo_original>
// kernel: inference2_forward.1
$region0: #{inference2_forward.1}
  #allocation0 [shape = 'u32[]', space=smem, size = 0x4, offset = 0x4, fixed_abs, tag = 'smem constant byte address 0x4 - core index']
  #allocation1 [shape = 'u32[72,128]{1,0:T(1,128)}', space=vmem, size = 0x9000, scoped, tag = 'internal scratch']
  %s0 = inlined_call_operand.vmem [shape: f32[2,16,64], index: 0, kind: input, shape index: {}]
  %s1 = inlined_call_operand.vmem [shape: f32[2,1,16], index: 1, kind: input, shape index: {}]
  %s2 = inlined_call_operand.vmem [shape: f32[3,16,16], index: 2, kind: input, shape index: {}]
  %s3 = inlined_call_operand.vmem [shape: f32[3,64,128], index: 3, kind: input, shape index: {}]
  %s4 = inlined_call_operand.vmem [shape: f32[1,1,128], index: 4, kind: input, shape index: {}]
  %s5 = inlined_call_operand.vmem [shape: f32[16,128], index: 5, kind: input, shape index: {}]
  %s6 = inlined_call_operand.vmem [shape: f32[4,3,128,16], index: 6, kind: input, shape index: {}]
  %s7 = inlined_call_operand.vmem [shape: f32[4,1,16], index: 7, kind: input, shape index: {}]
  %s8 = inlined_call_operand.hbm [shape: s32[2,16,16], index: 8, kind: output, shape index: {}]
  %s9 = sld [smem:[#allocation0]]
  $region65: #{inference2_forward.1} parent=0
    _
  %s11 = ssub.s32 1, %s9
  %s12 = scalar_select 0, %s11, %s9
  $region1: #{inference2_forward.1} parent=0
    #allocation2 [shape = 'u8[16384]{0}', space=vmem, size = 0x4000, scoped, tag = 'output window, operand 0']
    #allocation3 [shape = 's32[2]{0}', space=sflag, size = 0x8, scoped, tag = 'scoped memory for inference2_forward.1']
    %13 = vsyncpa [#allocation3], 0
    %s14 = scalar_lea.sflag [#allocation3], 1
    %15 = vsyncpa %s14, 0
    loop: start=0, step=1, limit=4
    $region2: #{inference2_forward.1} parent=1 // loop_pre_header
      _
    $region3: #{inference2_forward.1} parent=1 // loop_header
      %s17 = sphi 0, %s21
      %p18 = scmp.ge.s32.totalorder %s17, 4
      %s27 = sphi 0, %s29
      %s30 = sphi 0, %s27
      %s31 = sphi 0, %s30
      %s47 = sphi 0, %s31
      %s53 = sphi 0, %s55
      %s56 = sphi 0, %s53
      %s57 = sphi 0, %s56
      %s73 = sphi 0, %s57
      %s77 = sphi 0, %s77
      %s79 = sphi 0, %s77
      %s80 = sphi 0, %s79
      %s94 = sphi 0, %s80
      %s98 = sphi 0, %s98
      %s100 = sphi 0, %s98
      %s101 = sphi 0, %s100
      %s115 = sphi 0, %s101
      %s119 = sphi 0, %s119
      %s121 = sphi 0, %s119
      %s122 = sphi 0, %s121
      %s136 = sphi 0, %s122
      %s140 = sphi 0, %s140
      %s142 = sphi 0, %s140
      %s143 = sphi 0, %s142
      %s157 = sphi 0, %s143
      %s161 = sphi 0, %s161
      %s163 = sphi 0, %s161
      %s164 = sphi 0, %s163
      %s178 = sphi 0, %s164
      %s182 = sphi 0, %s182
      %s184 = sphi 0, %s182
      %s185 = sphi 0, %s184
      %s199 = sphi 0, %s185
      %s205 = sphi 0, %s207
      %s208 = sphi 0, %s205
      %s209 = sphi 0, %s208
      %s225 = sphi 0, %s209
    $region4: #{inference2_forward.1} parent=1 // loop_header_branch
      %20 = sbr.rel (%p18) target = $region8
    $region5: #{inference2_forward.1} parent=1 // loop_body
      %s22 = ssub.s32 %s17, 1
      %s23 = ssub.s32 %s17, 2
      %s24 = sadd.s32 %s17, 1
      %s25 = ssub.s32 %s17, %s24
      %p26 = scmp.eq.s32.totalorder %s25, 0
      %s28 = sadd.s32 %s27, 1
      %s29 = scalar_select %p26, %s27, %s28
      %p32 = pneg %p26
      %p33 = scmp.eq.s32.totalorder %s17, 1
      %p34 = por %p32, %p33
      %p35 = scmp.ne.s32.totalorder %s27, %s30
      %p36 = scmp.eq.s32.totalorder %s17, 0
      %p37 = por %p35, %p36
      %p38 = scmp.ne.s32.totalorder %s27, %s30
      %p39 = scmp.eq.s32.totalorder %s22, 1
      %p40 = por %p38, %p39
      %p41 = scmp.ne.s32.totalorder %s30, %s31
      %p42 = scmp.eq.s32.totalorder %s22, 0
      %p43 = por %p41, %p42
      %p44 = scmp.ne.s32.totalorder %s30, %s31
      %p45 = scmp.eq.s32.totalorder %s23, 1
      %p46 = por %p44, %p45
      %p48 = scmp.ne.s32.totalorder %s31, %s47
      %p49 = scmp.eq.s32.totalorder %s23, 0
      %p50 = por %p48, %p49
      %s51 = ssub.s32 %s17, %s24
      %p52 = scmp.eq.s32.totalorder %s51, 0
      %s54 = sadd.s32 %s53, 1
      %s55 = scalar_select %p52, %s53, %s54
      %p58 = pneg %p52
      %p59 = scmp.eq.s32.totalorder %s17, 1
      %p60 = por %p58, %p59
      %p61 = scmp.ne.s32.totalorder %s53, %s56
      %p62 = scmp.eq.s32.totalorder %s17, 0
      %p63 = por %p61, %p62
      %p64 = scmp.ne.s32.totalorder %s53, %s56
      %p65 = scmp.eq.s32.totalorder %s22, 1
      %p66 = por %p64, %p65
      %p67 = scmp.ne.s32.totalorder %s56, %s57
      %p68 = scmp.eq.s32.totalorder %s22, 0
      %p69 = por %p67, %p68
      %p70 = scmp.ne.s32.totalorder %s56, %s57
      %p71 = scmp.eq.s32.totalorder %s23, 1
      %p72 = por %p70, %p71
      %p74 = scmp.ne.s32.totalorder %s57, %s73
      %p75 = scmp.eq.s32.totalorder %s23, 0
      %p76 = por %p74, %p75
      %s78 = sadd.s32 %s77, 1
      %p81 = scmp.eq.s32.totalorder %s17, 1
      %p82 = scmp.ne.s32.totalorder %s77, %s79
      %p83 = scmp.eq.s32.totalorder %s17, 0
      %p84 = por %p82, %p83
      %p85 = scmp.ne.s32.totalorder %s77, %s79
      %p86 = scmp.eq.s32.totalorder %s22, 1
      %p87 = por %p85, %p86
      %p88 = scmp.ne.s32.totalorder %s79, %s80
      %p89 = scmp.eq.s32.totalorder %s22, 0
      %p90 = por %p88, %p89
      %p91 = scmp.ne.s32.totalorder %s79, %s80
      %p92 = scmp.eq.s32.totalorder %s23, 1
      %p93 = por %p91, %p92
      %p95 = scmp.ne.s32.totalorder %s80, %s94
      %p96 = scmp.eq.s32.totalorder %s23, 0
      %p97 = por %p95, %p96
      %s99 = sadd.s32 %s98, 1
      %p102 = scmp.eq.s32.totalorder %s17, 1
      %p103 = scmp.ne.s32.totalorder %s98, %s100
      %p104 = scmp.eq.s32.totalorder %s17, 0
      %p105 = por %p103, %p104
      %p106 = scmp.ne.s32.totalorder %s98, %s100
      %p107 = scmp.eq.s32.totalorder %s22, 1
      %p108 = por %p106, %p107
      %p109 = scmp.ne.s32.totalorder %s100, %s101
      %p110 = scmp.eq.s32.totalorder %s22, 0
      %p111 = por %p109, %p110
      %p112 = scmp.ne.s32.totalorder %s100, %s101
      %p113 = scmp.eq.s32.totalorder %s23, 1
      %p114 = por %p112, %p113
      %p116 = scmp.ne.s32.totalorder %s101, %s115
      %p117 = scmp.eq.s32.totalorder %s23, 0
      %p118 = por %p116, %p117
      %s120 = sadd.s32 %s119, 1
      %p123 = scmp.eq.s32.totalorder %s17, 1
      %p124 = scmp.ne.s32.totalorder %s119, %s121
      %p125 = scmp.eq.s32.totalorder %s17, 0
      %p126 = por %p124, %p125
      %p127 = scmp.ne.s32.totalorder %s119, %s121
      %p128 = scmp.eq.s32.totalorder %s22, 1
      %p129 = por %p127, %p128
      %p130 = scmp.ne.s32.totalorder %s121, %s122
      %p131 = scmp.eq.s32.totalorder %s22, 0
      %p132 = por %p130, %p131
      %p133 = scmp.ne.s32.totalorder %s121, %s122
      %p134 = scmp.eq.s32.totalorder %s23, 1
      %p135 = por %p133, %p134
      %p137 = scmp.ne.s32.totalorder %s122, %s136
      %p138 = scmp.eq.s32.totalorder %s23, 0
      %p139 = por %p137, %p138
      %s141 = sadd.s32 %s140, 1
      %p144 = scmp.eq.s32.totalorder %s17, 1
      %p145 = scmp.ne.s32.totalorder %s140, %s142
      %p146 = scmp.eq.s32.totalorder %s17, 0
      %p147 = por %p145, %p146
      %p148 = scmp.ne.s32.totalorder %s140, %s142
      %p149 = scmp.eq.s32.totalorder %s22, 1
      %p150 = por %p148, %p149
      %p151 = scmp.ne.s32.totalorder %s142, %s143
      %p152 = scmp.eq.s32.totalorder %s22, 0
      %p153 = por %p151, %p152
      %p154 = scmp.ne.s32.totalorder %s142, %s143
      %p155 = scmp.eq.s32.totalorder %s23, 1
      %p156 = por %p154, %p155
      %p158 = scmp.ne.s32.totalorder %s143, %s157
      %p159 = scmp.eq.s32.totalorder %s23, 0
      %p160 = por %p158, %p159
      %s162 = sadd.s32 %s161, 1
      %p165 = scmp.eq.s32.totalorder %s17, 1
      %p166 = scmp.ne.s32.totalorder %s161, %s163
      %p167 = scmp.eq.s32.totalorder %s17, 0
      %p168 = por %p166, %p167
      %p169 = scmp.ne.s32.totalorder %s161, %s163
      %p170 = scmp.eq.s32.totalorder %s22, 1
      %p171 = por %p169, %p170
      %p172 = scmp.ne.s32.totalorder %s163, %s164
      %p173 = scmp.eq.s32.totalorder %s22, 0
      %p174 = por %p172, %p173
      %p175 = scmp.ne.s32.totalorder %s163, %s164
      %p176 = scmp.eq.s32.totalorder %s23, 1
      %p177 = por %p175, %p176
      %p179 = scmp.ne.s32.totalorder %s164, %s178
      %p180 = scmp.eq.s32.totalorder %s23, 0
      %p181 = por %p179, %p180
      %s183 = sadd.s32 %s182, 1
      %p186 = scmp.eq.s32.totalorder %s17, 1
      %p187 = scmp.ne.s32.totalorder %s182, %s184
      %p188 = scmp.eq.s32.totalorder %s17, 0
      %p189 = por %p187, %p188
      %p190 = scmp.ne.s32.totalorder %s182, %s184
      %p191 = scmp.eq.s32.totalorder %s22, 1
      %p192 = por %p190, %p191
      %p193 = scmp.ne.s32.totalorder %s184, %s185
      %p194 = scmp.eq.s32.totalorder %s22, 0
      %p195 = por %p193, %p194
      %p196 = scmp.ne.s32.totalorder %s184, %s185
      %p197 = scmp.eq.s32.totalorder %s23, 1
      %p198 = por %p196, %p197
      %p200 = scmp.ne.s32.totalorder %s185, %s199
      %p201 = scmp.eq.s32.totalorder %s23, 0
      %p202 = por %p200, %p201
      %s203 = ssub.s32 %s17, %s24
      %p204 = scmp.eq.s32.totalorder %s203, 0
      %s206 = sadd.s32 %s205, 1
      %s207 = scalar_select %p204, %s205, %s206
      %p210 = pneg %p204
      %p211 = scmp.eq.s32.totalorder %s17, 1
      %p212 = por %p210, %p211
      %p213 = scmp.ne.s32.totalorder %s205, %s208
      %p214 = scmp.eq.s32.totalorder %s17, 0
      %p215 = por %p213, %p214
      %p216 = scmp.ne.s32.totalorder %s205, %s208
      %p217 = scmp.eq.s32.totalorder %s22, 1
      %p218 = por %p216, %p217
      %p219 = scmp.ne.s32.totalorder %s208, %s209
      %p220 = scmp.eq.s32.totalorder %s22, 0
      %p221 = por %p219, %p220
      %p222 = scmp.ne.s32.totalorder %s208, %s209
      %p223 = scmp.eq.s32.totalorder %s23, 1
      %p224 = por %p222, %p223
      %p226 = scmp.ne.s32.totalorder %s209, %s225
      %p227 = scmp.eq.s32.totalorder %s23, 0
      %p228 = por %p226, %p227
      %p229 = scmp.le.s32.totalorder 1, %s17
      %p230 = scmp.lt.s32.totalorder %s17, 3
      %p231 = pnand %p229, %p230
      %p232 = pneg %p231
      // Predicated region
      $region9: #{inference2_forward.1} parent=5 // pred_check
        _
      $region10: #{inference2_forward.1} parent=5 // pred_check_branch
        %234 = sbr.rel (%p231) target = $region12
      $region11: #{inference2_forward.1} parent=5 // pred_region
        %s235 = ssub.s32 %s17, 1
        // Predicated region
        $region13: #{inference2_forward.1} parent=11 // pred_check
          %p236 = pneg %p90
        $region14: #{inference2_forward.1} parent=11 // pred_check_branch
          %238 = sbr.rel (%p236) target = $region16
        $region15: #{inference2_forward.1} parent=11 // pred_region
          _
        $region16: #{inference2_forward.1} parent=11 // pred_fallthru
          _
        // Predicated region
        $region17: #{inference2_forward.1} parent=11 // pred_check
          %p239 = pneg %p111
        $region18: #{inference2_forward.1} parent=11 // pred_check_branch
          %241 = sbr.rel (%p239) target = $region20
        $region19: #{inference2_forward.1} parent=11 // pred_region
          _
        $region20: #{inference2_forward.1} parent=11 // pred_fallthru
          _
        // Predicated region
        $region21: #{inference2_forward.1} parent=11 // pred_check
          %p242 = pneg %p132
        $region22: #{inference2_forward.1} parent=11 // pred_check_branch
          %244 = sbr.rel (%p242) target = $region24
        $region23: #{inference2_forward.1} parent=11 // pred_region
          _
        $region24: #{inference2_forward.1} parent=11 // pred_fallthru
          _
        // Predicated region
        $region25: #{inference2_forward.1} parent=11 // pred_check
          %p245 = pneg %p153
        $region26: #{inference2_forward.1} parent=11 // pred_check_branch
          %247 = sbr.rel (%p245) target = $region28
        $region27: #{inference2_forward.1} parent=11 // pred_region
          _
        $region28: #{inference2_forward.1} parent=11 // pred_fallthru
          _
        // Predicated region
        $region29: #{inference2_forward.1} parent=11 // pred_check
          %p248 = pneg %p174
        $region30: #{inference2_forward.1} parent=11 // pred_check_branch
          %250 = sbr.rel (%p248) target = $region32
        $region31: #{inference2_forward.1} parent=11 // pred_region
          _
        $region32: #{inference2_forward.1} parent=11 // pred_fallthru
          _
        // Predicated region
        $region33: #{inference2_forward.1} parent=11 // pred_check
          %p251 = pneg %p195
        $region34: #{inference2_forward.1} parent=11 // pred_check_branch
          %253 = sbr.rel (%p251) target = $region36
        $region35: #{inference2_forward.1} parent=11 // pred_region
          _
        $region36: #{inference2_forward.1} parent=11 // pred_fallthru
          _
      $region12: #{inference2_forward.1} parent=5 // pred_fallthru
        _
      %p254 = scmp.lt.s32.totalorder %s17, 2
      // Predicated region
      $region37: #{inference2_forward.1} parent=5 // pred_check
        %p255 = pneg %p254
      $region38: #{inference2_forward.1} parent=5 // pred_check_branch
        %257 = sbr.rel (%p255) target = $region40
      $region39: #{inference2_forward.1} parent=5 // pred_region
        // Predicated region
        $region41: #{inference2_forward.1} parent=39 // pred_check
          %p258 = pneg %p37
        $region42: #{inference2_forward.1} parent=39 // pred_check_branch
          %260 = sbr.rel (%p258) target = $region44
        $region43: #{inference2_forward.1} parent=39 // pred_region
          %p261 = scmp.lt.s32.totalorder %s17, 1
          %s262 = scalar_select %p261, %s17, 1
          %s263 = smul.addr %s262, 2
          %s264 = smul.addr %s263, 8
          %s265 = scalar_lea.vmem %s0, %s264
        $region44: #{inference2_forward.1} parent=39 // pred_fallthru
          _
        // Predicated region
        $region45: #{inference2_forward.1} parent=39 // pred_check
          %p266 = pneg %p63
        $region46: #{inference2_forward.1} parent=39 // pred_check_branch
          %268 = sbr.rel (%p266) target = $region48
        $region47: #{inference2_forward.1} parent=39 // pred_region
          %p269 = scmp.lt.s32.totalorder %s17, 1
          %s270 = scalar_select %p269, %s17, 1
          %s271 = scalar_lea.vmem %s1, %s270
        $region48: #{inference2_forward.1} parent=39 // pred_fallthru
          _
      $region40: #{inference2_forward.1} parent=5 // pred_fallthru
        _
      %p272 = scmp.le.s32.totalorder 1, %s17
      %p273 = scmp.lt.s32.totalorder %s17, 3
      %p274 = pnand %p272, %p273
      %p275 = pneg %p274
      // Predicated region
      $region49: #{inference2_forward.1} parent=5 // pred_check
        _
      $region50: #{inference2_forward.1} parent=5 // pred_check_branch
        %277 = sbr.rel (%p274) target = $region52
      $region51: #{inference2_forward.1} parent=5 // pred_region
        %s278 = ssub.s32 %s17, 1
        %p279 = scmp.lt.s32.totalorder %s22, 1
        %s280 = scalar_select %p279, %s22, 1
        %s281 = smul.addr %s280, 2
        %s282 = smul.addr %s281, 8
        %s283 = scalar_lea.vmem %s0, %s282
        %p284 = pneg %p43
        %p285 = pneg %p40
        %p286 = scmp.lt.s32.totalorder %s22, 1
        %s287 = scalar_select %p286, %s22, 1
        %s288 = scalar_lea.vmem %s1, %s287
        %p289 = pneg %p69
        %p290 = pneg %p66
        %p291 = pneg %p90
        %p292 = pneg %p87
        %p293 = pneg %p111
        %p294 = pneg %p108
        %p295 = pneg %p132
        %p296 = pneg %p129
        %p297 = pneg %p153
        %p298 = pneg %p150
        %p299 = pneg %p174
        %p300 = pneg %p171
        %p301 = pneg %p195
        %p302 = pneg %p192
        %p303 = pneg %p221
        %p304 = pneg %p218
        %s305 = sand.u32 %s208, 1
        %s306 = scalar_lea.sflag [#allocation3], %s305
        %s307 = sand.u32 %s208, 1
        %s308 = smul.addr %s307, 16
        %s309 = scalar_lea.vmem [#allocation2], %s308
        %p310 = scmp.lt.s32.totalorder %s22, 1
        %s311 = scalar_select %p310, %s22, 1
        %s312 = smul.addr %s311, 2
        %s313 = smul.addr %s312, 8
        %s314 = scalar_lea.vmem %s0, %s313
        %p315 = scmp.lt.s32.totalorder %s22, 1
        %s316 = scalar_select %p315, %s22, 1
        %s317 = scalar_lea.vmem %s1, %s316
        %v318 = vld [vmem:[%s314] sm:$0xff]
        %v319 = vld [vmem:[%s314 + $0x8] sm:$0xff]
        %v320 = vld [vmem:[%s4] sm:$0x1]
        %v321 = vld [vmem:[%s317] sm:$0x1]
        %v322 = vld [vmem:[%s5] sm:$0xff]
        %v323 = vld [vmem:[%s5 + $0x8] sm:$0xff]
        %vm324 = vcmask 130048
        %v326 = vsel %vm324, %v321, 0
        %328 = vmatpush.msra.mxu0 0.0
        %329 = vmatpush.msra.mxu0 0.0
        %330 = vmatpush.msra.mxu0 0.0
        %331 = vmatpush.msra.mxu0 0.0
        %332 = vmatpush.msra.mxu0 0.0
        %333 = vmatpush.msra.mxu0 0.0
        %334 = vmatpush.msra.mxu0 0.0
        %335 = vmatpush.msra.mxu0 0.0
        %336 = vmatpush.msra.mxu0 0.0
        %337 = vmatpush.msra.mxu0 0.0
        %338 = vmatpush.msra.mxu0 0.0
        %339 = vmatpush.msra.mxu0 0.0
        %340 = vmatpush.msra.mxu0 0.0
        %341 = vmatpush.msra.mxu0 0.0
        %342 = vmatpush.msra.mxu0 %v323
        %343 = vmatpush.msra.mxu0 %v322
        %344 = vmatmul.f32.gmra.mxu0 %v326
        %v345 = vpop.f32.mrf.mxu0
        %v346 = vadd.f32 0.0, %v345
        %347 = vdwg.mxu0
        %v348 = vadd.f32 %v320, %v346
        %v349 = vld [vmem:[%s2] sm:$0xff]
        %v350 = vld [vmem:[%s2 + $0x8] sm:$0xff]
        %v352 = vsel %vm324, %v349, 0
        %v355 = vsel %vm324, %v350, 0
        %357 = vmatpush.msra.mxu0 0.0
        %358 = vmatpush.msra.mxu0 0.0
        %359 = vmatpush.msra.mxu0 0.0
        %360 = vmatpush.msra.mxu0 0.0
        %361 = vmatpush.msra.mxu0 0.0
        %362 = vmatpush.msra.mxu0 0.0
        %363 = vmatpush.msra.mxu0 0.0
        %364 = vmatpush.msra.mxu0 0.0
        %365 = vmatpush.msra.mxu0 0.0
        %366 = vmatpush.msra.mxu0 0.0
        %367 = vmatpush.msra.mxu0 0.0
        %368 = vmatpush.msra.mxu0 0.0
        %369 = vmatpush.msra.mxu0 0.0
        %370 = vmatpush.msra.mxu0 0.0
        %371 = vmatpush.msra.mxu0 %v319
        %372 = vmatpush.msra.mxu0 %v318
        %373 = vmatmul.f32.gmra.mxu0 %v352
        %v374 = vpop.f32.mrf.mxu0
        %v375 = vadd.f32 0.0, %v374
        %376 = vmatmul.f32.gmra.mxu0 %v355
        %v377 = vpop.f32.mrf.mxu0
        %v378 = vadd.f32 0.0, %v377
        %379 = vdwg.mxu0
        %v380 = vld [vmem:[%s3] sm:$0xff]
        %v381 = vld [vmem:[%s3 + $0x8] sm:$0xff]
        %v382 = vld [vmem:[%s3 + $0x10] sm:$0xff]
        %v383 = vld [vmem:[%s3 + $0x18] sm:$0xff]
        %v384 = vld [vmem:[%s3 + $0x20] sm:$0xff]
        %v385 = vld [vmem:[%s3 + $0x28] sm:$0xff]
        %v386 = vld [vmem:[%s3 + $0x30] sm:$0xff]
        %v387 = vld [vmem:[%s3 + $0x38] sm:$0xff]
        %s388 = scalar_lea.vmem %s2, 16
        %v389 = vld [vmem:[%s388] sm:$0xff]
        %v390 = vld [vmem:[%s388 + $0x8] sm:$0xff]
        %v392 = vsel %vm324, %v389, 0
        %v395 = vsel %vm324, %v390, 0
        %397 = vmatpush.msra.mxu0 0.0
        %398 = vmatpush.msra.mxu0 0.0
        %399 = vmatpush.msra.mxu0 0.0
        %400 = vmatpush.msra.mxu0 0.0
        %401 = vmatpush.msra.mxu0 0.0
        %402 = vmatpush.msra.mxu0 0.0
        %403 = vmatpush.msra.mxu0 0.0
        %404 = vmatpush.msra.mxu0 0.0
        %405 = vmatpush.msra.mxu0 0.0
        %406 = vmatpush.msra.mxu0 0.0
        %407 = vmatpush.msra.mxu0 0.0
        %408 = vmatpush.msra.mxu0 0.0
        %409 = vmatpush.msra.mxu0 0.0
        %410 = vmatpush.msra.mxu0 0.0
        %411 = vmatpush.msra.mxu0 %v319
        %412 = vmatpush.msra.mxu0 %v318
        %413 = vmatmul.f32.gmra.mxu0 %v392
        %v414 = vpop.f32.mrf.mxu0
        %v415 = vadd.f32 0.0, %v414
        %416 = vmatmul.f32.gmra.mxu0 %v395
        %v417 = vpop.f32.mrf.mxu0
        %v418 = vadd.f32 0.0, %v417
        %419 = vdwg.mxu0
        %s420 = scalar_lea.vmem %s3, 64
        %v421 = vld [vmem:[%s420] sm:$0xff]
        %v422 = vld [vmem:[%s420 + $0x8] sm:$0xff]
        %v423 = vld [vmem:[%s420 + $0x10] sm:$0xff]
        %v424 = vld [vmem:[%s420 + $0x18] sm:$0xff]
        %v425 = vld [vmem:[%s420 + $0x20] sm:$0xff]
        %v426 = vld [vmem:[%s420 + $0x28] sm:$0xff]
        %v427 = vld [vmem:[%s420 + $0x30] sm:$0xff]
        %v428 = vld [vmem:[%s420 + $0x38] sm:$0xff]
        %vm429 = vcmask 523264
        %v431 = vsel %vm429, %v415, 0
        %v434 = vsel %vm429, %v418, 0
        %436 = vmatpush.msra.mxu0 0.0
        %437 = vmatpush.msra.mxu0 0.0
        %438 = vmatpush.msra.mxu0 0.0
        %439 = vmatpush.msra.mxu0 0.0
        %440 = vmatpush.msra.mxu0 0.0
        %441 = vmatpush.msra.mxu0 0.0
        %442 = vmatpush.msra.mxu0 0.0
        %443 = vmatpush.msra.mxu0 0.0
        %444 = vmatpush.msra.mxu0 %v428
        %445 = vmatpush.msra.mxu0 %v427
        %446 = vmatpush.msra.mxu0 %v426
        %447 = vmatpush.msra.mxu0 %v425
        %448 = vmatpush.msra.mxu0 %v424
        %449 = vmatpush.msra.mxu0 %v423
        %450 = vmatpush.msra.mxu0 %v422
        %451 = vmatpush.msra.mxu0 %v421
        %452 = vmatmul.f32.gmra.mxu0 %v431
        %v453 = vpop.f32.mrf.mxu0
        %v454 = vadd.f32 0.0, %v453
        %455 = vmatmul.f32.gmra.mxu0 %v434
        %v456 = vpop.f32.mrf.mxu0
        %v457 = vadd.f32 0.0, %v456
        %458 = vdwg.mxu0
        %v460 = vsel %vm429, %v375, 0
        %v463 = vsel %vm429, %v378, 0
        %465 = vmatpush.msra.mxu0 0.0
        %466 = vmatpush.msra.mxu0 0.0
        %467 = vmatpush.msra.mxu0 0.0
        %468 = vmatpush.msra.mxu0 0.0
        %469 = vmatpush.msra.mxu0 0.0
        %470 = vmatpush.msra.mxu0 0.0
        %471 = vmatpush.msra.mxu0 0.0
        %472 = vmatpush.msra.mxu0 0.0
        %473 = vmatpush.msra.mxu0 %v387
        %474 = vmatpush.msra.mxu0 %v386
        %475 = vmatpush.msra.mxu0 %v385
        %476 = vmatpush.msra.mxu0 %v384
        %477 = vmatpush.msra.mxu0 %v383
        %478 = vmatpush.msra.mxu0 %v382
        %479 = vmatpush.msra.mxu0 %v381
        %480 = vmatpush.msra.mxu0 %v380
        %481 = vmatmul.f32.gmra.mxu0 %v460
        %v482 = vpop.f32.mrf.mxu0
        %v483 = vadd.f32 %v454, %v482
        %484 = vmatmul.f32.gmra.mxu0 %v463
        %v485 = vpop.f32.mrf.mxu0
        %v486 = vadd.f32 %v457, %v485
        %487 = vdwg.mxu0
        %s488 = scalar_lea.vmem %s2, 32
        %v489 = vld [vmem:[%s488] sm:$0xff]
        %v490 = vld [vmem:[%s488 + $0x8] sm:$0xff]
        %v492 = vsel %vm324, %v489, 0
        %v495 = vsel %vm324, %v490, 0
        %497 = vmatpush.msra.mxu0 0.0
        %498 = vmatpush.msra.mxu0 0.0
        %499 = vmatpush.msra.mxu0 0.0
        %500 = vmatpush.msra.mxu0 0.0
        %501 = vmatpush.msra.mxu0 0.0
        %502 = vmatpush.msra.mxu0 0.0
        %503 = vmatpush.msra.mxu0 0.0
        %504 = vmatpush.msra.mxu0 0.0
        %505 = vmatpush.msra.mxu0 0.0
        %506 = vmatpush.msra.mxu0 0.0
        %507 = vmatpush.msra.mxu0 0.0
        %508 = vmatpush.msra.mxu0 0.0
        %509 = vmatpush.msra.mxu0 0.0
        %510 = vmatpush.msra.mxu0 0.0
        %511 = vmatpush.msra.mxu0 %v319
        %512 = vmatpush.msra.mxu0 %v318
        %513 = vmatmul.f32.gmra.mxu0 %v492
        %v514 = vpop.f32.mrf.mxu0
        %v515 = vadd.f32 0.0, %v514
        %516 = vmatmul.f32.gmra.mxu0 %v495
        %v517 = vpop.f32.mrf.mxu0
        %v518 = vadd.f32 0.0, %v517
        %519 = vdwg.mxu0
        %s520 = scalar_lea.vmem %s3, 128
        %v521 = vld [vmem:[%s520] sm:$0xff]
        %v522 = vld [vmem:[%s520 + $0x8] sm:$0xff]
        %v523 = vld [vmem:[%s520 + $0x10] sm:$0xff]
        %v524 = vld [vmem:[%s520 + $0x18] sm:$0xff]
        %v525 = vld [vmem:[%s520 + $0x20] sm:$0xff]
        %v526 = vld [vmem:[%s520 + $0x28] sm:$0xff]
        %v527 = vld [vmem:[%s520 + $0x30] sm:$0xff]
        %v528 = vld [vmem:[%s520 + $0x38] sm:$0xff]
        %v530 = vsel %vm429, %v515, 0
        %v533 = vsel %vm429, %v518, 0
        %535 = vmatpush.msra.mxu0 0.0
        %536 = vmatpush.msra.mxu0 0.0
        %537 = vmatpush.msra.mxu0 0.0
        %538 = vmatpush.msra.mxu0 0.0
        %539 = vmatpush.msra.mxu0 0.0
        %540 = vmatpush.msra.mxu0 0.0
        %541 = vmatpush.msra.mxu0 0.0
        %542 = vmatpush.msra.mxu0 0.0
        %543 = vmatpush.msra.mxu0 %v528
        %544 = vmatpush.msra.mxu0 %v527
        %545 = vmatpush.msra.mxu0 %v526
        %546 = vmatpush.msra.mxu0 %v525
        %547 = vmatpush.msra.mxu0 %v524
        %548 = vmatpush.msra.mxu0 %v523
        %549 = vmatpush.msra.mxu0 %v522
        %550 = vmatpush.msra.mxu0 %v521
        %551 = vmatmul.f32.gmra.mxu0 %v530
        %v552 = vpop.f32.mrf.mxu0
        %v553 = vadd.f32 0.0, %v552
        %554 = vmatmul.f32.gmra.mxu0 %v533
        %v555 = vpop.f32.mrf.mxu0
        %v556 = vadd.f32 0.0, %v555
        %557 = vdwg.mxu0
        %v558 = vadd.f32 %v483, %v553
        %v559 = vadd.f32 %v486, %v556
        %v561 = vperm.slane %v348, 0
        %v563 = vadd.f32 %v558, %v561
        %v564 = vadd.f32 %v559, %v561
        %v565 = vmax.f32 %v563, 0.0
        %v566 = vmax.f32 %v564, 0.0
        %567 = vmatpush.msra.mxu0 0.0
        %568 = vmatpush.msra.mxu0 0.0
        %569 = vmatpush.msra.mxu0 0.0
        %570 = vmatpush.msra.mxu0 0.0
        %571 = vmatpush.msra.mxu0 0.0
        %572 = vmatpush.msra.mxu0 0.0
        %573 = vmatpush.msra.mxu0 0.0
        %574 = vmatpush.msra.mxu0 0.0
        %575 = vmatpush.msra.mxu0 0.0
        %576 = vmatpush.msra.mxu0 0.0
        %577 = vmatpush.msra.mxu0 0.0
        %578 = vmatpush.msra.mxu0 0.0
        %579 = vmatpush.msra.mxu0 0.0
        %580 = vmatpush.msra.mxu0 0.0
        %581 = vmatpush.msra.mxu0 %v566
        %582 = vmatpush.msra.mxu0 %v565
        %583 = vmatmul.f32.gmra.mxu0 %v352
        %v584 = vpop.f32.mrf.mxu0
        %v585 = vadd.f32 0.0, %v584
        %586 = vmatmul.f32.gmra.mxu0 %v355
        %v587 = vpop.f32.mrf.mxu0
        %v588 = vadd.f32 0.0, %v587
        %589 = vdwg.mxu0
        %590 = vmatpush.msra.mxu0 0.0
        %591 = vmatpush.msra.mxu0 0.0
        %592 = vmatpush.msra.mxu0 0.0
        %593 = vmatpush.msra.mxu0 0.0
        %594 = vmatpush.msra.mxu0 0.0
        %595 = vmatpush.msra.mxu0 0.0
        %596 = vmatpush.msra.mxu0 0.0
        %597 = vmatpush.msra.mxu0 0.0
        %598 = vmatpush.msra.mxu0 0.0
        %599 = vmatpush.msra.mxu0 0.0
        %600 = vmatpush.msra.mxu0 0.0
        %601 = vmatpush.msra.mxu0 0.0
        %602 = vmatpush.msra.mxu0 0.0
        %603 = vmatpush.msra.mxu0 0.0
        %604 = vmatpush.msra.mxu0 %v566
        %605 = vmatpush.msra.mxu0 %v565
        %606 = vmatmul.f32.gmra.mxu0 %v392
        %v607 = vpop.f32.mrf.mxu0
        %v608 = vadd.f32 0.0, %v607
        %609 = vmatmul.f32.gmra.mxu0 %v395
        %v610 = vpop.f32.mrf.mxu0
        %v611 = vadd.f32 0.0, %v610
        %612 = vdwg.mxu0
        %613 = vmatpush.msra.mxu0 0.0
        %614 = vmatpush.msra.mxu0 0.0
        %615 = vmatpush.msra.mxu0 0.0
        %616 = vmatpush.msra.mxu0 0.0
        %617 = vmatpush.msra.mxu0 0.0
        %618 = vmatpush.msra.mxu0 0.0
        %619 = vmatpush.msra.mxu0 0.0
        %620 = vmatpush.msra.mxu0 0.0
        %621 = vmatpush.msra.mxu0 0.0
        %622 = vmatpush.msra.mxu0 0.0
        %623 = vmatpush.msra.mxu0 0.0
        %624 = vmatpush.msra.mxu0 0.0
        %625 = vmatpush.msra.mxu0 0.0
        %626 = vmatpush.msra.mxu0 0.0
        %627 = vmatpush.msra.mxu0 %v566
        %628 = vmatpush.msra.mxu0 %v565
        %629 = vmatmul.f32.gmra.mxu0 %v492
        %v630 = vpop.f32.mrf.mxu0
        %v631 = vadd.f32 0.0, %v630
        %632 = vmatmul.f32.gmra.mxu0 %v495
        %v633 = vpop.f32.mrf.mxu0
        %v634 = vadd.f32 0.0, %v633
        %635 = vdwg.mxu0
        %v636 = vld [vmem:[%s6] sm:$0xff]
        %v637 = vld [vmem:[%s6 + $0x8] sm:$0xff]
        %v638 = vld [vmem:[%s6 + $0x10] sm:$0xff]
        %v639 = vld [vmem:[%s6 + $0x18] sm:$0xff]
        %v640 = vld [vmem:[%s6 + $0x20] sm:$0xff]
        %v641 = vld [vmem:[%s6 + $0x28] sm:$0xff]
        %v642 = vld [vmem:[%s6 + $0x30] sm:$0xff]
        %v643 = vld [vmem:[%s6 + $0x38] sm:$0xff]
        %v644 = vld [vmem:[%s6 + $0x40] sm:$0xff]
        %v645 = vld [vmem:[%s6 + $0x48] sm:$0xff]
        %v646 = vld [vmem:[%s6 + $0x50] sm:$0xff]
        %v647 = vld [vmem:[%s6 + $0x58] sm:$0xff]
        %v648 = vld [vmem:[%s6 + $0x60] sm:$0xff]
        %v649 = vld [vmem:[%s6 + $0x68] sm:$0xff]
        %v650 = vld [vmem:[%s6 + $0x70] sm:$0xff]
        %v651 = vld [vmem:[%s6 + $0x78] sm:$0xff]
        %s652 = scalar_lea.vmem %s6, 128
        %v653 = vld [vmem:[%s652] sm:$0xff]
        %v654 = vld [vmem:[%s652 + $0x8] sm:$0xff]
        %v655 = vld [vmem:[%s652 + $0x10] sm:$0xff]
        %v656 = vld [vmem:[%s652 + $0x18] sm:$0xff]
        %v657 = vld [vmem:[%s652 + $0x20] sm:$0xff]
        %v658 = vld [vmem:[%s652 + $0x28] sm:$0xff]
        %v659 = vld [vmem:[%s652 + $0x30] sm:$0xff]
        %v660 = vld [vmem:[%s652 + $0x38] sm:$0xff]
        %v661 = vld [vmem:[%s652 + $0x40] sm:$0xff]
        %v662 = vld [vmem:[%s652 + $0x48] sm:$0xff]
        %v663 = vld [vmem:[%s652 + $0x50] sm:$0xff]
        %v664 = vld [vmem:[%s652 + $0x58] sm:$0xff]
        %v665 = vld [vmem:[%s652 + $0x60] sm:$0xff]
        %v666 = vld [vmem:[%s652 + $0x68] sm:$0xff]
        %v667 = vld [vmem:[%s652 + $0x70] sm:$0xff]
        %v668 = vld [vmem:[%s652 + $0x78] sm:$0xff]
        %669 = vmatpush.msra.mxu0 %v668
        %670 = vmatpush.msra.mxu0 %v667
        %671 = vmatpush.msra.mxu0 %v666
        %672 = vmatpush.msra.mxu0 %v665
        %673 = vmatpush.msra.mxu0 %v664
        %674 = vmatpush.msra.mxu0 %v663
        %675 = vmatpush.msra.mxu0 %v662
        %676 = vmatpush.msra.mxu0 %v661
        %677 = vmatpush.msra.mxu0 %v660
        %678 = vmatpush.msra.mxu0 %v659
        %679 = vmatpush.msra.mxu0 %v658
        %680 = vmatpush.msra.mxu0 %v657
        %681 = vmatpush.msra.mxu0 %v656
        %682 = vmatpush.msra.mxu0 %v655
        %683 = vmatpush.msra.mxu0 %v654
        %684 = vmatpush.msra.mxu0 %v653
        %685 = vmatmul.f32.gmra.mxu0 %v608
        %v686 = vpop.f32.mrf.mxu0
        %v687 = vadd.f32 0.0, %v686
        %688 = vmatmul.f32.gmra.mxu0 %v611
        %v689 = vpop.f32.mrf.mxu0
        %v690 = vadd.f32 0.0, %v689
        %691 = vdwg.mxu0
        %692 = vmatpush.msra.mxu0 %v651
        %693 = vmatpush.msra.mxu0 %v650
        %694 = vmatpush.msra.mxu0 %v649
        %695 = vmatpush.msra.mxu0 %v648
        %696 = vmatpush.msra.mxu0 %v647
        %697 = vmatpush.msra.mxu0 %v646
        %698 = vmatpush.msra.mxu0 %v645
        %699 = vmatpush.msra.mxu0 %v644
        %700 = vmatpush.msra.mxu0 %v643
        %701 = vmatpush.msra.mxu0 %v642
        %702 = vmatpush.msra.mxu0 %v641
        %703 = vmatpush.msra.mxu0 %v640
        %704 = vmatpush.msra.mxu0 %v639
        %705 = vmatpush.msra.mxu0 %v638
        %706 = vmatpush.msra.mxu0 %v637
        %707 = vmatpush.msra.mxu0 %v636
        %708 = vmatmul.f32.gmra.mxu0 %v585
        %v709 = vpop.f32.mrf.mxu0
        %v710 = vadd.f32 %v687, %v709
        %711 = vmatmul.f32.gmra.mxu0 %v588
        %v712 = vpop.f32.mrf.mxu0
        %v713 = vadd.f32 %v690, %v712
        %714 = vdwg.mxu0
        %s715 = scalar_lea.vmem %s6, 256
        %v716 = vld [vmem:[%s715] sm:$0xff]
        %v717 = vld [vmem:[%s715 + $0x8] sm:$0xff]
        %v718 = vld [vmem:[%s715 + $0x10] sm:$0xff]
        %v719 = vld [vmem:[%s715 + $0x18] sm:$0xff]
        %v720 = vld [vmem:[%s715 + $0x20] sm:$0xff]
        %v721 = vld [vmem:[%s715 + $0x28] sm:$0xff]
        %v722 = vld [vmem:[%s715 + $0x30] sm:$0xff]
        %v723 = vld [vmem:[%s715 + $0x38] sm:$0xff]
        %v724 = vld [vmem:[%s715 + $0x40] sm:$0xff]
        %v725 = vld [vmem:[%s715 + $0x48] sm:$0xff]
        %v726 = vld [vmem:[%s715 + $0x50] sm:$0xff]
        %v727 = vld [vmem:[%s715 + $0x58] sm:$0xff]
        %v728 = vld [vmem:[%s715 + $0x60] sm:$0xff]
        %v729 = vld [vmem:[%s715 + $0x68] sm:$0xff]
        %v730 = vld [vmem:[%s715 + $0x70] sm:$0xff]
        %v731 = vld [vmem:[%s715 + $0x78] sm:$0xff]
        %732 = vmatpush.msra.mxu0 %v731
        %733 = vmatpush.msra.mxu0 %v730
        %734 = vmatpush.msra.mxu0 %v729
        %735 = vmatpush.msra.mxu0 %v728
        %736 = vmatpush.msra.mxu0 %v727
        %737 = vmatpush.msra.mxu0 %v726
        %738 = vmatpush.msra.mxu0 %v725
        %739 = vmatpush.msra.mxu0 %v724
        %740 = vmatpush.msra.mxu0 %v723
        %741 = vmatpush.msra.mxu0 %v722
        %742 = vmatpush.msra.mxu0 %v721
        %743 = vmatpush.msra.mxu0 %v720
        %744 = vmatpush.msra.mxu0 %v719
        %745 = vmatpush.msra.mxu0 %v718
        %746 = vmatpush.msra.mxu0 %v717
        %747 = vmatpush.msra.mxu0 %v716
        %748 = vmatmul.f32.gmra.mxu0 %v631
        %v749 = vpop.f32.mrf.mxu0
        %v750 = vadd.f32 0.0, %v749
        %751 = vmatmul.f32.gmra.mxu0 %v634
        %v752 = vpop.f32.mrf.mxu0
        %v753 = vadd.f32 0.0, %v752
        %754 = vdwg.mxu0
        %v755 = vadd.f32 %v710, %v750
        %v756 = vadd.f32 %v713, %v753
        %v757 = vld [vmem:[%s7] sm:$0x1]
        %v759 = vperm.slane %v757, 0
        %v761 = vadd.f32 %v755, %v759
        %v762 = vadd.f32 %v756, %v759
        %s763 = scalar_lea.vmem %s6, 384
        %v764 = vld [vmem:[%s763] sm:$0xff]
        %v765 = vld [vmem:[%s763 + $0x8] sm:$0xff]
        %v766 = vld [vmem:[%s763 + $0x10] sm:$0xff]
        %v767 = vld [vmem:[%s763 + $0x18] sm:$0xff]
        %v768 = vld [vmem:[%s763 + $0x20] sm:$0xff]
        %v769 = vld [vmem:[%s763 + $0x28] sm:$0xff]
        %v770 = vld [vmem:[%s763 + $0x30] sm:$0xff]
        %v771 = vld [vmem:[%s763 + $0x38] sm:$0xff]
        %v772 = vld [vmem:[%s763 + $0x40] sm:$0xff]
        %v773 = vld [vmem:[%s763 + $0x48] sm:$0xff]
        %v774 = vld [vmem:[%s763 + $0x50] sm:$0xff]
        %v775 = vld [vmem:[%s763 + $0x58] sm:$0xff]
        %v776 = vld [vmem:[%s763 + $0x60] sm:$0xff]
        %v777 = vld [vmem:[%s763 + $0x68] sm:$0xff]
        %v778 = vld [vmem:[%s763 + $0x70] sm:$0xff]
        %v779 = vld [vmem:[%s763 + $0x78] sm:$0xff]
        %s780 = scalar_lea.vmem %s6, 512
        %v781 = vld [vmem:[%s780] sm:$0xff]
        %v782 = vld [vmem:[%s780 + $0x8] sm:$0xff]
        %v783 = vld [vmem:[%s780 + $0x10] sm:$0xff]
        %v784 = vld [vmem:[%s780 + $0x18] sm:$0xff]
        %v785 = vld [vmem:[%s780 + $0x20] sm:$0xff]
        %v786 = vld [vmem:[%s780 + $0x28] sm:$0xff]
        %v787 = vld [vmem:[%s780 + $0x30] sm:$0xff]
        %v788 = vld [vmem:[%s780 + $0x38] sm:$0xff]
        %v789 = vld [vmem:[%s780 + $0x40] sm:$0xff]
        %v790 = vld [vmem:[%s780 + $0x48] sm:$0xff]
        %v791 = vld [vmem:[%s780 + $0x50] sm:$0xff]
        %v792 = vld [vmem:[%s780 + $0x58] sm:$0xff]
        %v793 = vld [vmem:[%s780 + $0x60] sm:$0xff]
        %v794 = vld [vmem:[%s780 + $0x68] sm:$0xff]
        %v795 = vld [vmem:[%s780 + $0x70] sm:$0xff]
        %v796 = vld [vmem:[%s780 + $0x78] sm:$0xff]
        %797 = vmatpush.msra.mxu0 %v796
        %798 = vmatpush.msra.mxu0 %v795
        %799 = vmatpush.msra.mxu0 %v794
        %800 = vmatpush.msra.mxu0 %v793
        %801 = vmatpush.msra.mxu0 %v792
        %802 = vmatpush.msra.mxu0 %v791
        %803 = vmatpush.msra.mxu0 %v790
        %804 = vmatpush.msra.mxu0 %v789
        %805 = vmatpush.msra.mxu0 %v788
        %806 = vmatpush.msra.mxu0 %v787
        %807 = vmatpush.msra.mxu0 %v786
        %808 = vmatpush.msra.mxu0 %v785
        %809 = vmatpush.msra.mxu0 %v784
        %810 = vmatpush.msra.mxu0 %v783
        %811 = vmatpush.msra.mxu0 %v782
        %812 = vmatpush.msra.mxu0 %v781
        %813 = vmatmul.f32.gmra.mxu0 %v608
        %v814 = vpop.f32.mrf.mxu0
        %v815 = vadd.f32 0.0, %v814
        %816 = vmatmul.f32.gmra.mxu0 %v611
        %v817 = vpop.f32.mrf.mxu0
        %v818 = vadd.f32 0.0, %v817
        %819 = vdwg.mxu0
        %820 = vmatpush.msra.mxu0 %v779
        %821 = vmatpush.msra.mxu0 %v778
        %822 = vmatpush.msra.mxu0 %v777
        %823 = vmatpush.msra.mxu0 %v776
        %824 = vmatpush.msra.mxu0 %v775
        %825 = vmatpush.msra.mxu0 %v774
        %826 = vmatpush.msra.mxu0 %v773
        %827 = vmatpush.msra.mxu0 %v772
        %828 = vmatpush.msra.mxu0 %v771
        %829 = vmatpush.msra.mxu0 %v770
        %830 = vmatpush.msra.mxu0 %v769
        %831 = vmatpush.msra.mxu0 %v768
        %832 = vmatpush.msra.mxu0 %v767
        %833 = vmatpush.msra.mxu0 %v766
        %834 = vmatpush.msra.mxu0 %v765
        %835 = vmatpush.msra.mxu0 %v764
        %836 = vmatmul.f32.gmra.mxu0 %v585
        %v837 = vpop.f32.mrf.mxu0
        %v838 = vadd.f32 %v815, %v837
        %839 = vmatmul.f32.gmra.mxu0 %v588
        %v840 = vpop.f32.mrf.mxu0
        %v841 = vadd.f32 %v818, %v840
        %842 = vdwg.mxu0
        %s843 = scalar_lea.vmem %s6, 640
        %v844 = vld [vmem:[%s843] sm:$0xff]
        %v845 = vld [vmem:[%s843 + $0x8] sm:$0xff]
        %v846 = vld [vmem:[%s843 + $0x10] sm:$0xff]
        %v847 = vld [vmem:[%s843 + $0x18] sm:$0xff]
        %v848 = vld [vmem:[%s843 + $0x20] sm:$0xff]
        %v849 = vld [vmem:[%s843 + $0x28] sm:$0xff]
        %v850 = vld [vmem:[%s843 + $0x30] sm:$0xff]
        %v851 = vld [vmem:[%s843 + $0x38] sm:$0xff]
        %v852 = vld [vmem:[%s843 + $0x40] sm:$0xff]
        %v853 = vld [vmem:[%s843 + $0x48] sm:$0xff]
        %v854 = vld [vmem:[%s843 + $0x50] sm:$0xff]
        %v855 = vld [vmem:[%s843 + $0x58] sm:$0xff]
        %v856 = vld [vmem:[%s843 + $0x60] sm:$0xff]
        %v857 = vld [vmem:[%s843 + $0x68] sm:$0xff]
        %v858 = vld [vmem:[%s843 + $0x70] sm:$0xff]
        %v859 = vld [vmem:[%s843 + $0x78] sm:$0xff]
        %860 = vmatpush.msra.mxu0 %v859
        %861 = vmatpush.msra.mxu0 %v858
        %862 = vmatpush.msra.mxu0 %v857
        %863 = vmatpush.msra.mxu0 %v856
        %864 = vmatpush.msra.mxu0 %v855
        %865 = vmatpush.msra.mxu0 %v854
        %866 = vmatpush.msra.mxu0 %v853
        %867 = vmatpush.msra.mxu0 %v852
        %868 = vmatpush.msra.mxu0 %v851
        %869 = vmatpush.msra.mxu0 %v850
        %870 = vmatpush.msra.mxu0 %v849
        %871 = vmatpush.msra.mxu0 %v848
        %872 = vmatpush.msra.mxu0 %v847
        %873 = vmatpush.msra.mxu0 %v846
        %874 = vmatpush.msra.mxu0 %v845
        %875 = vmatpush.msra.mxu0 %v844
        %876 = vmatmul.f32.gmra.mxu0 %v631
        %v877 = vpop.f32.mrf.mxu0
        %v878 = vadd.f32 0.0, %v877
        %879 = vmatmul.f32.gmra.mxu0 %v634
        %v880 = vpop.f32.mrf.mxu0
        %v881 = vadd.f32 0.0, %v880
        %882 = vdwg.mxu0
        %v883 = vadd.f32 %v838, %v878
        %v884 = vadd.f32 %v841, %v881
        %s885 = scalar_lea.vmem %s7, 1
        %v886 = vld [vmem:[%s885] sm:$0x1]
        %v888 = vperm.slane %v886, 0
        %v890 = vadd.f32 %v883, %v888
        %v891 = vadd.f32 %v884, %v888
        %vm892 = vcmp.gt.f32.partialorder %v890, %v761
        %vm893 = vcmp.gt.f32.partialorder %v891, %v762
        %v894 = vsel %vm892, %v890, %v761
        %v895 = vsel %vm893, %v891, %v762
        %v896 = vsel %vm892, 1, 0
        %v897 = vsel %vm893, 1, 0
        %s898 = scalar_lea.vmem %s6, 768
        %v899 = vld [vmem:[%s898] sm:$0xff]
        %v900 = vld [vmem:[%s898 + $0x8] sm:$0xff]
        %v901 = vld [vmem:[%s898 + $0x10] sm:$0xff]
        %v902 = vld [vmem:[%s898 + $0x18] sm:$0xff]
        %v903 = vld [vmem:[%s898 + $0x20] sm:$0xff]
        %v904 = vld [vmem:[%s898 + $0x28] sm:$0xff]
        %v905 = vld [vmem:[%s898 + $0x30] sm:$0xff]
        %v906 = vld [vmem:[%s898 + $0x38] sm:$0xff]
        %v907 = vld [vmem:[%s898 + $0x40] sm:$0xff]
        %v908 = vld [vmem:[%s898 + $0x48] sm:$0xff]
        %v909 = vld [vmem:[%s898 + $0x50] sm:$0xff]
        %v910 = vld [vmem:[%s898 + $0x58] sm:$0xff]
        %v911 = vld [vmem:[%s898 + $0x60] sm:$0xff]
        %v912 = vld [vmem:[%s898 + $0x68] sm:$0xff]
        %v913 = vld [vmem:[%s898 + $0x70] sm:$0xff]
        %v914 = vld [vmem:[%s898 + $0x78] sm:$0xff]
        %s915 = scalar_lea.vmem %s6, 896
        %v916 = vld [vmem:[%s915] sm:$0xff]
        %v917 = vld [vmem:[%s915 + $0x8] sm:$0xff]
        %v918 = vld [vmem:[%s915 + $0x10] sm:$0xff]
        %v919 = vld [vmem:[%s915 + $0x18] sm:$0xff]
        %v920 = vld [vmem:[%s915 + $0x20] sm:$0xff]
        %v921 = vld [vmem:[%s915 + $0x28] sm:$0xff]
        %v922 = vld [vmem:[%s915 + $0x30] sm:$0xff]
        %v923 = vld [vmem:[%s915 + $0x38] sm:$0xff]
        %v924 = vld [vmem:[%s915 + $0x40] sm:$0xff]
        %v925 = vld [vmem:[%s915 + $0x48] sm:$0xff]
        %v926 = vld [vmem:[%s915 + $0x50] sm:$0xff]
        %v927 = vld [vmem:[%s915 + $0x58] sm:$0xff]
        %v928 = vld [vmem:[%s915 + $0x60] sm:$0xff]
        %v929 = vld [vmem:[%s915 + $0x68] sm:$0xff]
        %v930 = vld [vmem:[%s915 + $0x70] sm:$0xff]
        %v931 = vld [vmem:[%s915 + $0x78] sm:$0xff]
        %932 = vmatpush.msra.mxu0 %v931
        %933 = vmatpush.msra.mxu0 %v930
        %934 = vmatpush.msra.mxu0 %v929
        %935 = vmatpush.msra.mxu0 %v928
        %936 = vmatpush.msra.mxu0 %v927
        %937 = vmatpush.msra.mxu0 %v926
        %938 = vmatpush.msra.mxu0 %v925
        %939 = vmatpush.msra.mxu0 %v924
        %940 = vmatpush.msra.mxu0 %v923
        %941 = vmatpush.msra.mxu0 %v922
        %942 = vmatpush.msra.mxu0 %v921
        %943 = vmatpush.msra.mxu0 %v920
        %944 = vmatpush.msra.mxu0 %v919
        %945 = vmatpush.msra.mxu0 %v918
        %946 = vmatpush.msra.mxu0 %v917
        %947 = vmatpush.msra.mxu0 %v916
        %948 = vmatmul.f32.gmra.mxu0 %v608
        %v949 = vpop.f32.mrf.mxu0
        %v950 = vadd.f32 0.0, %v949
        %951 = vmatmul.f32.gmra.mxu0 %v611
        %v952 = vpop.f32.mrf.mxu0
        %v953 = vadd.f32 0.0, %v952
        %954 = vdwg.mxu0
        %955 = vmatpush.msra.mxu0 %v914
        %956 = vmatpush.msra.mxu0 %v913
        %957 = vmatpush.msra.mxu0 %v912
        %958 = vmatpush.msra.mxu0 %v911
        %959 = vmatpush.msra.mxu0 %v910
        %960 = vmatpush.msra.mxu0 %v909
        %961 = vmatpush.msra.mxu0 %v908
        %962 = vmatpush.msra.mxu0 %v907
        %963 = vmatpush.msra.mxu0 %v906
        %964 = vmatpush.msra.mxu0 %v905
        %965 = vmatpush.msra.mxu0 %v904
        %966 = vmatpush.msra.mxu0 %v903
        %967 = vmatpush.msra.mxu0 %v902
        %968 = vmatpush.msra.mxu0 %v901
        %969 = vmatpush.msra.mxu0 %v900
        %970 = vmatpush.msra.mxu0 %v899
        %971 = vmatmul.f32.gmra.mxu0 %v585
        %v972 = vpop.f32.mrf.mxu0
        %v973 = vadd.f32 %v950, %v972
        %974 = vmatmul.f32.gmra.mxu0 %v588
        %v975 = vpop.f32.mrf.mxu0
        %v976 = vadd.f32 %v953, %v975
        %977 = vdwg.mxu0
        %s978 = scalar_lea.vmem %s6, 1024
        %v979 = vld [vmem:[%s978] sm:$0xff]
        %v980 = vld [vmem:[%s978 + $0x8] sm:$0xff]
        %v981 = vld [vmem:[%s978 + $0x10] sm:$0xff]
        %v982 = vld [vmem:[%s978 + $0x18] sm:$0xff]
        %v983 = vld [vmem:[%s978 + $0x20] sm:$0xff]
        %v984 = vld [vmem:[%s978 + $0x28] sm:$0xff]
        %v985 = vld [vmem:[%s978 + $0x30] sm:$0xff]
        %v986 = vld [vmem:[%s978 + $0x38] sm:$0xff]
        %v987 = vld [vmem:[%s978 + $0x40] sm:$0xff]
        %v988 = vld [vmem:[%s978 + $0x48] sm:$0xff]
        %v989 = vld [vmem:[%s978 + $0x50] sm:$0xff]
        %v990 = vld [vmem:[%s978 + $0x58] sm:$0xff]
        %v991 = vld [vmem:[%s978 + $0x60] sm:$0xff]
        %v992 = vld [vmem:[%s978 + $0x68] sm:$0xff]
        %v993 = vld [vmem:[%s978 + $0x70] sm:$0xff]
        %v994 = vld [vmem:[%s978 + $0x78] sm:$0xff]
        %995 = vmatpush.msra.mxu0 %v994
        %996 = vmatpush.msra.mxu0 %v993
        %997 = vmatpush.msra.mxu0 %v992
        %998 = vmatpush.msra.mxu0 %v991
        %999 = vmatpush.msra.mxu0 %v990
        %1000 = vmatpush.msra.mxu0 %v989
        %1001 = vmatpush.msra.mxu0 %v988
        %1002 = vmatpush.msra.mxu0 %v987
        %1003 = vmatpush.msra.mxu0 %v986
        %1004 = vmatpush.msra.mxu0 %v985
        %1005 = vmatpush.msra.mxu0 %v984
        %1006 = vmatpush.msra.mxu0 %v983
        %1007 = vmatpush.msra.mxu0 %v982
        %1008 = vmatpush.msra.mxu0 %v981
        %1009 = vmatpush.msra.mxu0 %v980
        %1010 = vmatpush.msra.mxu0 %v979
        %1011 = vmatmul.f32.gmra.mxu0 %v631
        %v1012 = vpop.f32.mrf.mxu0
        %v1013 = vadd.f32 0.0, %v1012
        %1014 = vmatmul.f32.gmra.mxu0 %v634
        %v1015 = vpop.f32.mrf.mxu0
        %v1016 = vadd.f32 0.0, %v1015
        %1017 = vdwg.mxu0
        %v1018 = vadd.f32 %v973, %v1013
        %v1019 = vadd.f32 %v976, %v1016
        %s1020 = scalar_lea.vmem %s7, 2
        %v1021 = vld [vmem:[%s1020] sm:$0x1]
        %v1023 = vperm.slane %v1021, 0
        %v1025 = vadd.f32 %v1018, %v1023
        %v1026 = vadd.f32 %v1019, %v1023
        %vm1027 = vcmp.gt.f32.partialorder %v1025, %v894
        %vm1028 = vcmp.gt.f32.partialorder %v1026, %v895
        %v1029 = vsel %vm1027, %v1025, %v894
        %v1030 = vsel %vm1028, %v1026, %v895
        %v1031 = vsel %vm1027, 2, %v896
        %v1032 = vsel %vm1028, 2, %v897
        %s1033 = scalar_lea.vmem %s6, 1152
        %v1034 = vld [vmem:[%s1033] sm:$0xff]
        %v1035 = vld [vmem:[%s1033 + $0x8] sm:$0xff]
        %v1036 = vld [vmem:[%s1033 + $0x10] sm:$0xff]
        %v1037 = vld [vmem:[%s1033 + $0x18] sm:$0xff]
        %v1038 = vld [vmem:[%s1033 + $0x20] sm:$0xff]
        %v1039 = vld [vmem:[%s1033 + $0x28] sm:$0xff]
        %v1040 = vld [vmem:[%s1033 + $0x30] sm:$0xff]
        %v1041 = vld [vmem:[%s1033 + $0x38] sm:$0xff]
        %v1042 = vld [vmem:[%s1033 + $0x40] sm:$0xff]
        %v1043 = vld [vmem:[%s1033 + $0x48] sm:$0xff]
        %v1044 = vld [vmem:[%s1033 + $0x50] sm:$0xff]
        %v1045 = vld [vmem:[%s1033 + $0x58] sm:$0xff]
        %v1046 = vld [vmem:[%s1033 + $0x60] sm:$0xff]
        %v1047 = vld [vmem:[%s1033 + $0x68] sm:$0xff]
        %v1048 = vld [vmem:[%s1033 + $0x70] sm:$0xff]
        %v1049 = vld [vmem:[%s1033 + $0x78] sm:$0xff]
        %s1050 = scalar_lea.vmem %s6, 1280
        %v1051 = vld [vmem:[%s1050] sm:$0xff]
        %v1052 = vld [vmem:[%s1050 + $0x8] sm:$0xff]
        %v1053 = vld [vmem:[%s1050 + $0x10] sm:$0xff]
        %v1054 = vld [vmem:[%s1050 + $0x18] sm:$0xff]
        %v1055 = vld [vmem:[%s1050 + $0x20] sm:$0xff]
        %v1056 = vld [vmem:[%s1050 + $0x28] sm:$0xff]
        %v1057 = vld [vmem:[%s1050 + $0x30] sm:$0xff]
        %v1058 = vld [vmem:[%s1050 + $0x38] sm:$0xff]
        %v1059 = vld [vmem:[%s1050 + $0x40] sm:$0xff]
        %v1060 = vld [vmem:[%s1050 + $0x48] sm:$0xff]
        %v1061 = vld [vmem:[%s1050 + $0x50] sm:$0xff]
        %v1062 = vld [vmem:[%s1050 + $0x58] sm:$0xff]
        %v1063 = vld [vmem:[%s1050 + $0x60] sm:$0xff]
        %v1064 = vld [vmem:[%s1050 + $0x68] sm:$0xff]
        %v1065 = vld [vmem:[%s1050 + $0x70] sm:$0xff]
        %v1066 = vld [vmem:[%s1050 + $0x78] sm:$0xff]
        %1067 = vmatpush.msra.mxu0 %v1066
        %1068 = vmatpush.msra.mxu0 %v1065
        %1069 = vmatpush.msra.mxu0 %v1064
        %1070 = vmatpush.msra.mxu0 %v1063
        %1071 = vmatpush.msra.mxu0 %v1062
        %1072 = vmatpush.msra.mxu0 %v1061
        %1073 = vmatpush.msra.mxu0 %v1060
        %1074 = vmatpush.msra.mxu0 %v1059
        %1075 = vmatpush.msra.mxu0 %v1058
        %1076 = vmatpush.msra.mxu0 %v1057
        %1077 = vmatpush.msra.mxu0 %v1056
        %1078 = vmatpush.msra.mxu0 %v1055
        %1079 = vmatpush.msra.mxu0 %v1054
        %1080 = vmatpush.msra.mxu0 %v1053
        %1081 = vmatpush.msra.mxu0 %v1052
        %1082 = vmatpush.msra.mxu0 %v1051
        %1083 = vmatmul.f32.gmra.mxu0 %v608
        %v1084 = vpop.f32.mrf.mxu0
        %v1085 = vadd.f32 0.0, %v1084
        %1086 = vmatmul.f32.gmra.mxu0 %v611
        %v1087 = vpop.f32.mrf.mxu0
        %v1088 = vadd.f32 0.0, %v1087
        %1089 = vdwg.mxu0
        %1090 = vmatpush.msra.mxu0 %v1049
        %1091 = vmatpush.msra.mxu0 %v1048
        %1092 = vmatpush.msra.mxu0 %v1047
        %1093 = vmatpush.msra.mxu0 %v1046
        %1094 = vmatpush.msra.mxu0 %v1045
        %1095 = vmatpush.msra.mxu0 %v1044
        %1096 = vmatpush.msra.mxu0 %v1043
        %1097 = vmatpush.msra.mxu0 %v1042
        %1098 = vmatpush.msra.mxu0 %v1041
        %1099 = vmatpush.msra.mxu0 %v1040
        %1100 = vmatpush.msra.mxu0 %v1039
        %1101 = vmatpush.msra.mxu0 %v1038
        %1102 = vmatpush.msra.mxu0 %v1037
        %1103 = vmatpush.msra.mxu0 %v1036
        %1104 = vmatpush.msra.mxu0 %v1035
        %1105 = vmatpush.msra.mxu0 %v1034
        %1106 = vmatmul.f32.gmra.mxu0 %v585
        %v1107 = vpop.f32.mrf.mxu0
        %v1108 = vadd.f32 %v1085, %v1107
        %1109 = vmatmul.f32.gmra.mxu0 %v588
        %v1110 = vpop.f32.mrf.mxu0
        %v1111 = vadd.f32 %v1088, %v1110
        %1112 = vdwg.mxu0
        %s1113 = scalar_lea.vmem %s6, 1408
        %v1114 = vld [vmem:[%s1113] sm:$0xff]
        %v1115 = vld [vmem:[%s1113 + $0x8] sm:$0xff]
        %v1116 = vld [vmem:[%s1113 + $0x10] sm:$0xff]
        %v1117 = vld [vmem:[%s1113 + $0x18] sm:$0xff]
        %v1118 = vld [vmem:[%s1113 + $0x20] sm:$0xff]
        %v1119 = vld [vmem:[%s1113 + $0x28] sm:$0xff]
        %v1120 = vld [vmem:[%s1113 + $0x30] sm:$0xff]
        %v1121 = vld [vmem:[%s1113 + $0x38] sm:$0xff]
        %v1122 = vld [vmem:[%s1113 + $0x40] sm:$0xff]
        %v1123 = vld [vmem:[%s1113 + $0x48] sm:$0xff]
        %v1124 = vld [vmem:[%s1113 + $0x50] sm:$0xff]
        %v1125 = vld [vmem:[%s1113 + $0x58] sm:$0xff]
        %v1126 = vld [vmem:[%s1113 + $0x60] sm:$0xff]
        %v1127 = vld [vmem:[%s1113 + $0x68] sm:$0xff]
        %v1128 = vld [vmem:[%s1113 + $0x70] sm:$0xff]
        %v1129 = vld [vmem:[%s1113 + $0x78] sm:$0xff]
        %1130 = vmatpush.msra.mxu0 %v1129
        %1131 = vmatpush.msra.mxu0 %v1128
        %1132 = vmatpush.msra.mxu0 %v1127
        %1133 = vmatpush.msra.mxu0 %v1126
        %1134 = vmatpush.msra.mxu0 %v1125
        %1135 = vmatpush.msra.mxu0 %v1124
        %1136 = vmatpush.msra.mxu0 %v1123
        %1137 = vmatpush.msra.mxu0 %v1122
        %1138 = vmatpush.msra.mxu0 %v1121
        %1139 = vmatpush.msra.mxu0 %v1120
        %1140 = vmatpush.msra.mxu0 %v1119
        %1141 = vmatpush.msra.mxu0 %v1118
        %1142 = vmatpush.msra.mxu0 %v1117
        %1143 = vmatpush.msra.mxu0 %v1116
        %1144 = vmatpush.msra.mxu0 %v1115
        %1145 = vmatpush.msra.mxu0 %v1114
        %1146 = vmatmul.f32.gmra.mxu0 %v631
        %v1147 = vpop.f32.mrf.mxu0
        %v1148 = vadd.f32 0.0, %v1147
        %1149 = vmatmul.f32.gmra.mxu0 %v634
        %v1150 = vpop.f32.mrf.mxu0
        %v1151 = vadd.f32 0.0, %v1150
        %1152 = vdwg.mxu0
        %v1153 = vadd.f32 %v1108, %v1148
        %v1154 = vadd.f32 %v1111, %v1151
        %s1155 = scalar_lea.vmem %s7, 3
        %v1156 = vld [vmem:[%s1155] sm:$0x1]
        %v1158 = vperm.slane %v1156, 0
        %v1160 = vadd.f32 %v1153, %v1158
        %v1161 = vadd.f32 %v1154, %v1158
        %vm1162 = vcmp.gt.f32.partialorder %v1160, %v1029
        %vm1163 = vcmp.gt.f32.partialorder %v1161, %v1030
        %v1164 = vsel %vm1162, 3, %v1031
        %v1165 = vsel %vm1163, 3, %v1032
        %1166 = vst.msk [vmem:[%s309] sm:$0xff] %vm324, %v1164
        %1167 = vst.msk [vmem:[%s309 + $0x8] sm:$0xff] %vm324, %v1165
        %s1168 = sand.u32 %s208, 1
        %s1169 = scalar_lea.sflag [#allocation3], %s1168
        %s1170 = sand.u32 %s208, 1
        %s1171 = smul.addr %s1170, 16
        %s1172 = scalar_lea.vmem [#allocation2], %s1171
        // Predicated region
        $region53: #{inference2_forward.1} parent=51 // pred_check
          %p1173 = pneg %p218
        $region54: #{inference2_forward.1} parent=51 // pred_check_branch
          %1175 = sbr.rel (%p1173) target = $region56
        $region55: #{inference2_forward.1} parent=51 // pred_region
          %1177 = vsyncadd %s1169, 0
          %s1178 = smul.addr %s22, 2
          %s1179 = smul.addr %s1178, 8
          %s1180 = scalar_lea.hbm %s8, %s1179
          %s1181 = sshll.u32 %s1172, 4
          %s1182 = int_to_ptr.vmem [resolvable:$true] %s1181
          %s1183 = sshll.u32 %s1180, 4
          %s1184 = int_to_ptr.hbm [resolvable:$true] %s1183
          %1189 = dma.vmem_to_hbm [thread:$0]  %s1182, 256, %s1184, %s1169, 128, 128, 8
        $region56: #{inference2_forward.1} parent=51 // pred_fallthru
          _
      $region52: #{inference2_forward.1} parent=5 // pred_fallthru
        _
      %p1190 = scmp.le.s32.totalorder 2, %s17
      // Predicated region
      $region57: #{inference2_forward.1} parent=5 // pred_check
        %p1191 = pneg %p1190
      $region58: #{inference2_forward.1} parent=5 // pred_check_branch
        %1193 = sbr.rel (%p1191) target = $region60
      $region59: #{inference2_forward.1} parent=5 // pred_region
        %s1194 = ssub.s32 %s17, 2
        // Predicated region
        $region61: #{inference2_forward.1} parent=59 // pred_check
          %p1195 = pneg %p224
        $region62: #{inference2_forward.1} parent=59 // pred_check_branch
          %1197 = sbr.rel (%p1195) target = $region64
        $region63: #{inference2_forward.1} parent=59 // pred_region
          %s1198 = sand.u32 %s209, 1
          %s1199 = scalar_lea.sflag [#allocation3], %s1198
          %s1200 = sand.u32 %s209, 1
          %s1201 = smul.addr %s1200, 16
          %s1202 = scalar_lea.vmem [#allocation2], %s1201
          %1204 = dma.done %s1199, 256
        $region64: #{inference2_forward.1} parent=59 // pred_fallthru
          _
      $region60: #{inference2_forward.1} parent=5 // pred_fallthru
        _
    $region6: #{inference2_forward.1} parent=1 // loop_footer
      %s21 = sadd.s32 1, %s17
    $region7: #{inference2_forward.1} parent=1 // loop_footer_branch
      %16 = sbr.rel target = $region3
    $region8: #{inference2_forward.1} parent=1 // loop_exit
      _
    %1205 = vsyncpa [#allocation3], 1
    %s1206 = scalar_lea.sflag [#allocation3], 1
    %1207 = vsyncpa %s1206, 1

</llo_original>
